<compile_context>
chip_gen: v5e
topology: v5e:2x2
jax: 0.10.0
libtpu: 0.0.40
codegen_flags: <defaults>
</compile_context>

<pallas_src>
import numpy as np
import jax
import jax.numpy as jnp
from jax import lax
from jax.experimental import pallas as pl
from jax.experimental.pallas import tpu as pltpu


# ---------------------------------------------------------------------------
# Parameter construction (deterministic, in-script)
# ---------------------------------------------------------------------------
def create_sinusoidal_embeddings(n_pos, dim):
    position_enc = np.array(
        [[pos / np.power(10000, 2 * (j // 2) / dim) for j in range(dim)]
         for pos in range(n_pos)], dtype=np.float64)
    out = np.zeros((n_pos, dim), dtype=np.float32)
    out[:, 0::2] = np.sin(position_enc[:, 0::2])
    out[:, 1::2] = np.cos(position_enc[:, 1::2])
    return jnp.asarray(out)


def make_params(vocab_size, max_pos, dim, key):
    word_emb = 0.02 * jax.random.normal(key, (vocab_size, dim), jnp.float32)
    # padding_idx=0 -> row 0 is zeros (matches nn.Embedding(padding_idx=0))
    word_emb = word_emb.at[0].set(0.0)
    pos_emb = create_sinusoidal_embeddings(max_pos, dim)  # sinusoidal_pos_embds
    gamma = jnp.ones((1, dim), jnp.float32)               # LayerNorm weight
    beta = jnp.zeros((1, dim), jnp.float32)                # LayerNorm bias
    return word_emb, pos_emb, gamma, beta


# ---------------------------------------------------------------------------
# Pallas kernel: prefetched batched row-DMA gather + pos add + LayerNorm
# ---------------------------------------------------------------------------
def _make_kernel(tq, dim, pos_blocks, steps_per_core, eps=1e-12, issue_group=8):
    def kernel(ids_ref,          # SMEM scalar-prefetch: (B*S,) int32 token ids
               word_hbm,         # full word table, left in HBM (pl.ANY)
               pos_ref,          # (S, dim) VMEM-resident position table
               gamma_ref,        # (1, dim)
               beta_ref,         # (1, dim)
               out_ref,          # (TQ, dim) output tile
               wbuf,             # (2, TQ, dim) double-buffered gathered rows
               sems):            # (2,) shared DMA semaphores, one per slot
        c = pl.program_id(0)                      # core index (size 1 off v7x)
        j = pl.program_id(1)                      # step within this core
        step = c * steps_per_core + j             # global token-block index

        def issue_block(s, slot):
            """Start the TQ row-gather DMAs of token block `s` into wbuf[slot]."""
            base = pl.multiple_of(s * tq, tq)

            def grp(g, carry):
                r0 = pl.multiple_of(g * issue_group, issue_group)
                for u in range(issue_group):      # small unrolled group
                    r = r0 + u
                    tok = ids_ref[base + r]
                    pltpu.make_async_copy(
                        word_hbm.at[pl.ds(tok, 1)],
                        wbuf.at[slot, pl.ds(r, 1)],
                        sems.at[slot]).start()
                return carry

            lax.fori_loop(0, tq // issue_group, grp, 0, unroll=False)

        cur = j % 2
        nxt = 1 - cur

        # Prime the pipeline on this core's first step.
        @pl.when(j == 0)
        def _():
            issue_block(step, cur)

        # Prefetch the next block's rows (hidden under this step's compute +
        # output writeback).  Guarded on the last step of this core.
        @pl.when(j + 1 < steps_per_core)
        def _():
            issue_block(step + 1, nxt)

        # Single aggregate wait: the TQ row copies each signal dim*itemsize
        # bytes on sems[cur]; this descriptor's byte count is the whole
        # (TQ, dim) slab, so one wait covers all of them.
        pltpu.make_async_copy(wbuf.at[cur], wbuf.at[cur], sems.at[cur]).wait()

        # Position rows for this block, sliced from the resident table.
        pos_off = pl.multiple_of((step % pos_blocks) * tq, tq)
        pos = pos_ref[pl.ds(pos_off, tq), :]

        # ---- add position embeddings + LayerNorm on the whole tile (f32) ----
        x = wbuf[cur].astype(jnp.float32) + pos.astype(jnp.float32)
        mean = jnp.mean(x, axis=-1, keepdims=True)
        centered = x - mean
        var = jnp.mean(centered * centered, axis=-1, keepdims=True)
        scale = gamma_ref[...] * lax.rsqrt(var + eps)   # gamma folded into scale
        out_ref[...] = (centered * scale + beta_ref[...]).astype(out_ref.dtype)

    return kernel


def _default_tq(S, cap=512):
    """Largest multiple of 8 that divides S and is <= cap."""
    best = None
    t = 8
    while t <= min(S, cap):
        if S % t == 0:
            best = t
        t += 8
    return best


def _core_split(n_steps):
    """Split token blocks across the 2 TensorCores on v7x; 1 elsewhere."""
    try:
        kind = jax.devices()[0].device_kind.lower()
    except Exception:
        kind = ""
    if "v7" in kind and n_steps % 2 == 0:
        return 2
    return 1


def distilbert_embeddings(input_ids, word_emb, pos_emb, gamma, beta, *, tq=None):
    """input_ids: (B, S) int32 -> (B, S, dim) float32."""
    B, S = input_ids.shape
    dim = word_emb.shape[1]
    n_tok = B * S

    assert dim % 128 == 0, "dim must be a multiple of 128 (lane-dense tiles)"
    if tq is None:
        tq = _default_tq(S)
    assert tq is not None and tq % 8 == 0 and S % tq == 0, \
        "TQ must be a multiple of 8 that divides the sequence length"

    n_steps = n_tok // tq
    pos_blocks = S // tq

    n_core = _core_split(n_steps)
    steps_per_core = n_steps // n_core

    # NOTE: the full flat id vector is scalar-prefetched into SMEM; for very
    # large B*S switch to per-core id slices to respect SMEM capacity.
    flat_ids = input_ids.reshape(n_tok).astype(jnp.int32)
    pos_rows = pos_emb[:S]                      # (S, dim), VMEM-resident

    word_isz = jnp.dtype(word_emb.dtype).itemsize
    pos_isz = jnp.dtype(pos_rows.dtype).itemsize

    grid_spec = pltpu.PrefetchScalarGridSpec(
        num_scalar_prefetch=1,
        grid=(n_core, steps_per_core),
        in_specs=[
            # word table: stays in HBM, gathered with manual row DMAs
            pl.BlockSpec(memory_space=pl.ANY),
            # position table: one whole-array block, constant index -> resident
            pl.BlockSpec((S, dim), lambda c, j, ids: (0, 0)),
            # LayerNorm gamma / beta: single (1, dim) block, same every step
            pl.BlockSpec((1, dim), lambda c, j, ids: (0, 0)),
            pl.BlockSpec((1, dim), lambda c, j, ids: (0, 0)),
        ],
        out_specs=pl.BlockSpec(
            (tq, dim), lambda c, j, ids: (c * steps_per_core + j, 0)),
        scratch_shapes=[
            pltpu.VMEM((2, tq, dim), word_emb.dtype),   # double-buffered gather
            pltpu.SemaphoreType.DMA((2,)),              # one shared sem per slot
        ],
    )

    # VMEM budget: resident pos table (x2 pipeline bufs), double-buffered wbuf,
    # double-buffered output blocks, gamma/beta, plus headroom.  Cap below the
    # v7x 64 MiB physical ceiling.
    needed = (2 * S * dim * pos_isz
              + 2 * tq * dim * word_isz
              + 2 * tq * dim * 4
              + 4 * dim * 4)
    vmem_limit = int(min(max(needed + (4 << 20), 32 << 20), 56 << 20))

    if n_core == 2:
        # v7x: leading core axis splits token blocks across the two TCs; the
        # inner axis carries the gather prefetch so it stays ARBITRARY.
        dims = (pltpu.CORE_PARALLEL, pltpu.ARBITRARY)
    else:
        # Cross-step prefetch is a sequential carry -> token axis is ARBITRARY.
        dims = (pltpu.ARBITRARY, pltpu.ARBITRARY)

    cost = pl.CostEstimate(
        flops=10 * n_tok * dim,                 # add + mean/var + scale/shift
        transcendentals=n_tok,                  # one rsqrt per token
        bytes_accessed=(n_tok * dim * word_isz  # word gather
                        + S * dim * pos_isz     # pos table (read once)
                        + n_tok * dim * 4),     # output writeback
    )

    out_flat = pl.pallas_call(
        _make_kernel(tq, dim, pos_blocks, steps_per_core),
        out_shape=jax.ShapeDtypeStruct((n_tok, dim), jnp.float32),
        grid_spec=grid_spec,
        compiler_params=pltpu.CompilerParams(
            dimension_semantics=dims,
            vmem_limit_bytes=vmem_limit),
        cost_estimate=cost,
    )(flat_ids, word_emb, pos_rows, gamma, beta)

    return out_flat.reshape(B, S, dim)


# ---------------------------------------------------------------------------
# Pure-JAX reference for correctness check
# ---------------------------------------------------------------------------
def reference_embeddings(input_ids, word_emb, pos_emb, gamma, beta):
    B, S = input_ids.shape
    we = jnp.take(word_emb, input_ids, axis=0)                    # (B, S, D)
    pe = jnp.take(pos_emb, jnp.arange(S), axis=0)[None, :, :]     # (1, S, D)
    x = (we + pe).astype(jnp.float32)
    mean = jnp.mean(x, axis=-1, keepdims=True)
    var = jnp.mean((x - mean) ** 2, axis=-1, keepdims=True)
    y = (x - mean) * lax.rsqrt(var + 1e-12)
    return y * gamma.reshape(1, 1, -1) + beta.reshape(1, 1, -1)


if __name__ == "__main__":
    # Small config consistent with the module
    vocab_size = 64
    max_position_embeddings = 32
    dim = 128
    B, S = 2, 16

    key = jax.random.PRNGKey(0)
    k_params, k_ids = jax.random.split(key)
    word_emb, pos_emb, gamma, beta = make_params(
        vocab_size, max_position_embeddings, dim, k_params)

    input_ids = jax.random.randint(k_ids, (B, S), 0, vocab_size, dtype=jnp.int32)

    out = distilbert_embeddings(input_ids, word_emb, pos_emb, gamma, beta)
    out = jax.block_until_ready(out)

    ref = reference_embeddings(input_ids, word_emb, pos_emb, gamma, beta)
    assert out.shape == (B, S, dim)
    np.testing.assert_allclose(np.asarray(out), np.asarray(ref),
                               rtol=1e-5, atol=1e-5)
    print("KERNEL_OK")
</pallas_src>

<mosaic_0001>
module attributes {stable_mosaic.version = 11 : i64} {
  func.func @kernel(%arg0: i32, %arg1: i32, %arg2: memref<32xi32, #tpu.memory_space<smem>>, %arg3: memref<64x128xf32, #tpu.memory_space<any>>, %arg4: memref<16x128xf32, #tpu.memory_space<vmem>>, %arg5: memref<1x128xf32, #tpu.memory_space<vmem>>, %arg6: memref<1x128xf32, #tpu.memory_space<vmem>>, %arg7: memref<16x128xf32, #tpu.memory_space<vmem>>, %arg8: memref<2x16x128xf32, #tpu.memory_space<vmem>>, %arg9: memref<2x!tpu.dma_semaphore, #tpu.memory_space<semaphore_mem>>) attributes {dimension_semantics = [#tpu.dimension_semantics<arbitrary>, #tpu.dimension_semantics<arbitrary>], iteration_bounds = array<i64: 1, 2>, scalar_prefetch = 1 : i64, scratch_operands = 2 : i64, tpu.core_type = #tpu.core_type<tc>, window_params = [{}, {pipeline_mode = #tpu.pipeline_mode<synchronous>, transform_indices = @transform_1, window_bounds = array<i64: 16, 128>}, {pipeline_mode = #tpu.pipeline_mode<synchronous>, transform_indices = @transform_2, window_bounds = array<i64: 1, 128>}, {pipeline_mode = #tpu.pipeline_mode<synchronous>, transform_indices = @transform_3, window_bounds = array<i64: 1, 128>}, {transform_indices = @transform_4, window_bounds = array<i64: 16, 128>}]} {
    %c2_i32 = arith.constant 2 : i32
    %0 = arith.muli %arg0, %c2_i32 : i32
    %1 = arith.addi %0, %arg1 : i32
    %c2_i32_0 = arith.constant 2 : i32
    %c0_i32 = arith.constant 0 : i32
    %2 = arith.cmpi eq, %c2_i32_0, %c0_i32 : i32
    %c1_i32 = arith.constant 1 : i32
    %3 = arith.select %2, %c1_i32, %c2_i32_0 : i32
    %4 = arith.remsi %arg1, %3 : i32
    %c0_i32_1 = arith.constant 0 : i32
    %5 = arith.cmpi ne, %4, %c0_i32_1 : i32
    %c0_i32_2 = arith.constant 0 : i32
    %6 = arith.cmpi slt, %4, %c0_i32_2 : i32
    %c0_i32_3 = arith.constant 0 : i32
    %7 = arith.cmpi slt, %3, %c0_i32_3 : i32
    %8 = arith.xori %6, %7 : i1
    %9 = arith.andi %8, %5 : i1
    %10 = arith.addi %4, %3 : i32
    %11 = arith.select %9, %10, %4 : i32
    %c1_i32_4 = arith.constant 1 : i32
    %12 = arith.subi %c1_i32_4, %11 : i32
    %c0_i32_5 = arith.constant 0 : i32
    %13 = arith.cmpi eq, %arg1, %c0_i32_5 : i32
    %14 = arith.extui %13 : i1 to i32
    %c0_i32_6 = arith.constant 0 : i32
    %15 = arith.cmpi ne, %14, %c0_i32_6 : i32
    scf.if %15 {
      %c16_i32_32 = arith.constant 16 : i32
      %67 = arith.muli %1, %c16_i32_32 : i32
      %68 = tpu.assume_multiple %67, 16 : i32
      %c0_i32_33 = arith.constant 0 : i32
      %c2_i32_34 = arith.constant 2 : i32
      %69 = arith.addi %c0_i32_33, %c2_i32_34 : i32
      %c1_i32_35 = arith.constant 1 : i32
      scf.for %arg10 = %c0_i32_33 to %69 step %c1_i32_35  : i32 {
        %c8_i32 = arith.constant 8 : i32
        %70 = arith.muli %arg10, %c8_i32 : i32
        %71 = tpu.assume_multiple %70, 8 : i32
        %c0_i32_37 = arith.constant 0 : i32
        %72 = arith.addi %71, %c0_i32_37 : i32
        %73 = arith.addi %68, %72 : i32
        %74 = arith.index_cast %73 : i32 to index
        %75 = memref.load %arg2[%74] : memref<32xi32, #tpu.memory_space<smem>>
        %c0_i32_38 = arith.constant 0 : i32
        %76 = tpu.memref_slice %arg3[%75, %c0_i32_38] : memref<64x128xf32, #tpu.memory_space<any>> -> memref<1x128xf32, #tpu.memory_space<any>>
        %c0_i32_39 = arith.constant 0 : i32
        %77 = tpu.memref_slice %arg8[%11, %72, %c0_i32_39] : memref<2x16x128xf32, #tpu.memory_space<vmem>> -> memref<1x1x128xf32, #tpu.memory_space<vmem>>
        %78 = tpu.memref_squeeze %77 : memref<1x1x128xf32, #tpu.memory_space<vmem>> -> memref<1x128xf32, #tpu.memory_space<vmem>>
        %79 = tpu.memref_slice %arg9[%11] : memref<2x!tpu.dma_semaphore, #tpu.memory_space<semaphore_mem>> -> memref<1x!tpu.dma_semaphore, #tpu.memory_space<semaphore_mem>>
        %80 = tpu.memref_squeeze %79 : memref<1x!tpu.dma_semaphore, #tpu.memory_space<semaphore_mem>> -> memref<!tpu.dma_semaphore, #tpu.memory_space<semaphore_mem>>
        tpu.enqueue_dma source(%76 : memref<1x128xf32, #tpu.memory_space<any>>) target(%78 : memref<1x128xf32, #tpu.memory_space<vmem>>) target_semaphore(%80 : memref<!tpu.dma_semaphore, #tpu.memory_space<semaphore_mem>>)
        %c1_i32_40 = arith.constant 1 : i32
        %81 = arith.addi %71, %c1_i32_40 : i32
        %82 = arith.addi %68, %81 : i32
        %83 = arith.index_cast %82 : i32 to index
        %84 = memref.load %arg2[%83] : memref<32xi32, #tpu.memory_space<smem>>
        %c0_i32_41 = arith.constant 0 : i32
        %85 = tpu.memref_slice %arg3[%84, %c0_i32_41] : memref<64x128xf32, #tpu.memory_space<any>> -> memref<1x128xf32, #tpu.memory_space<any>>
        %c0_i32_42 = arith.constant 0 : i32
        %86 = tpu.memref_slice %arg8[%11, %81, %c0_i32_42] : memref<2x16x128xf32, #tpu.memory_space<vmem>> -> memref<1x1x128xf32, #tpu.memory_space<vmem>>
        %87 = tpu.memref_squeeze %86 : memref<1x1x128xf32, #tpu.memory_space<vmem>> -> memref<1x128xf32, #tpu.memory_space<vmem>>
        %88 = tpu.memref_slice %arg9[%11] : memref<2x!tpu.dma_semaphore, #tpu.memory_space<semaphore_mem>> -> memref<1x!tpu.dma_semaphore, #tpu.memory_space<semaphore_mem>>
        %89 = tpu.memref_squeeze %88 : memref<1x!tpu.dma_semaphore, #tpu.memory_space<semaphore_mem>> -> memref<!tpu.dma_semaphore, #tpu.memory_space<semaphore_mem>>
        tpu.enqueue_dma source(%85 : memref<1x128xf32, #tpu.memory_space<any>>) target(%87 : memref<1x128xf32, #tpu.memory_space<vmem>>) target_semaphore(%89 : memref<!tpu.dma_semaphore, #tpu.memory_space<semaphore_mem>>)
        %c2_i32_43 = arith.constant 2 : i32
        %90 = arith.addi %71, %c2_i32_43 : i32
        %91 = arith.addi %68, %90 : i32
        %92 = arith.index_cast %91 : i32 to index
        %93 = memref.load %arg2[%92] : memref<32xi32, #tpu.memory_space<smem>>
        %c0_i32_44 = arith.constant 0 : i32
        %94 = tpu.memref_slice %arg3[%93, %c0_i32_44] : memref<64x128xf32, #tpu.memory_space<any>> -> memref<1x128xf32, #tpu.memory_space<any>>
        %c0_i32_45 = arith.constant 0 : i32
        %95 = tpu.memref_slice %arg8[%11, %90, %c0_i32_45] : memref<2x16x128xf32, #tpu.memory_space<vmem>> -> memref<1x1x128xf32, #tpu.memory_space<vmem>>
        %96 = tpu.memref_squeeze %95 : memref<1x1x128xf32, #tpu.memory_space<vmem>> -> memref<1x128xf32, #tpu.memory_space<vmem>>
        %97 = tpu.memref_slice %arg9[%11] : memref<2x!tpu.dma_semaphore, #tpu.memory_space<semaphore_mem>> -> memref<1x!tpu.dma_semaphore, #tpu.memory_space<semaphore_mem>>
        %98 = tpu.memref_squeeze %97 : memref<1x!tpu.dma_semaphore, #tpu.memory_space<semaphore_mem>> -> memref<!tpu.dma_semaphore, #tpu.memory_space<semaphore_mem>>
        tpu.enqueue_dma source(%94 : memref<1x128xf32, #tpu.memory_space<any>>) target(%96 : memref<1x128xf32, #tpu.memory_space<vmem>>) target_semaphore(%98 : memref<!tpu.dma_semaphore, #tpu.memory_space<semaphore_mem>>)
        %c3_i32 = arith.constant 3 : i32
        %99 = arith.addi %71, %c3_i32 : i32
        %100 = arith.addi %68, %99 : i32
        %101 = arith.index_cast %100 : i32 to index
        %102 = memref.load %arg2[%101] : memref<32xi32, #tpu.memory_space<smem>>
        %c0_i32_46 = arith.constant 0 : i32
        %103 = tpu.memref_slice %arg3[%102, %c0_i32_46] : memref<64x128xf32, #tpu.memory_space<any>> -> memref<1x128xf32, #tpu.memory_space<any>>
        %c0_i32_47 = arith.constant 0 : i32
        %104 = tpu.memref_slice %arg8[%11, %99, %c0_i32_47] : memref<2x16x128xf32, #tpu.memory_space<vmem>> -> memref<1x1x128xf32, #tpu.memory_space<vmem>>
        %105 = tpu.memref_squeeze %104 : memref<1x1x128xf32, #tpu.memory_space<vmem>> -> memref<1x128xf32, #tpu.memory_space<vmem>>
        %106 = tpu.memref_slice %arg9[%11] : memref<2x!tpu.dma_semaphore, #tpu.memory_space<semaphore_mem>> -> memref<1x!tpu.dma_semaphore, #tpu.memory_space<semaphore_mem>>
        %107 = tpu.memref_squeeze %106 : memref<1x!tpu.dma_semaphore, #tpu.memory_space<semaphore_mem>> -> memref<!tpu.dma_semaphore, #tpu.memory_space<semaphore_mem>>
        tpu.enqueue_dma source(%103 : memref<1x128xf32, #tpu.memory_space<any>>) target(%105 : memref<1x128xf32, #tpu.memory_space<vmem>>) target_semaphore(%107 : memref<!tpu.dma_semaphore, #tpu.memory_space<semaphore_mem>>)
        %c4_i32 = arith.constant 4 : i32
        %108 = arith.addi %71, %c4_i32 : i32
        %109 = arith.addi %68, %108 : i32
        %110 = arith.index_cast %109 : i32 to index
        %111 = memref.load %arg2[%110] : memref<32xi32, #tpu.memory_space<smem>>
        %c0_i32_48 = arith.constant 0 : i32
        %112 = tpu.memref_slice %arg3[%111, %c0_i32_48] : memref<64x128xf32, #tpu.memory_space<any>> -> memref<1x128xf32, #tpu.memory_space<any>>
        %c0_i32_49 = arith.constant 0 : i32
        %113 = tpu.memref_slice %arg8[%11, %108, %c0_i32_49] : memref<2x16x128xf32, #tpu.memory_space<vmem>> -> memref<1x1x128xf32, #tpu.memory_space<vmem>>
        %114 = tpu.memref_squeeze %113 : memref<1x1x128xf32, #tpu.memory_space<vmem>> -> memref<1x128xf32, #tpu.memory_space<vmem>>
        %115 = tpu.memref_slice %arg9[%11] : memref<2x!tpu.dma_semaphore, #tpu.memory_space<semaphore_mem>> -> memref<1x!tpu.dma_semaphore, #tpu.memory_space<semaphore_mem>>
        %116 = tpu.memref_squeeze %115 : memref<1x!tpu.dma_semaphore, #tpu.memory_space<semaphore_mem>> -> memref<!tpu.dma_semaphore, #tpu.memory_space<semaphore_mem>>
        tpu.enqueue_dma source(%112 : memref<1x128xf32, #tpu.memory_space<any>>) target(%114 : memref<1x128xf32, #tpu.memory_space<vmem>>) target_semaphore(%116 : memref<!tpu.dma_semaphore, #tpu.memory_space<semaphore_mem>>)
        %c5_i32 = arith.constant 5 : i32
        %117 = arith.addi %71, %c5_i32 : i32
        %118 = arith.addi %68, %117 : i32
        %119 = arith.index_cast %118 : i32 to index
        %120 = memref.load %arg2[%119] : memref<32xi32, #tpu.memory_space<smem>>
        %c0_i32_50 = arith.constant 0 : i32
        %121 = tpu.memref_slice %arg3[%120, %c0_i32_50] : memref<64x128xf32, #tpu.memory_space<any>> -> memref<1x128xf32, #tpu.memory_space<any>>
        %c0_i32_51 = arith.constant 0 : i32
        %122 = tpu.memref_slice %arg8[%11, %117, %c0_i32_51] : memref<2x16x128xf32, #tpu.memory_space<vmem>> -> memref<1x1x128xf32, #tpu.memory_space<vmem>>
        %123 = tpu.memref_squeeze %122 : memref<1x1x128xf32, #tpu.memory_space<vmem>> -> memref<1x128xf32, #tpu.memory_space<vmem>>
        %124 = tpu.memref_slice %arg9[%11] : memref<2x!tpu.dma_semaphore, #tpu.memory_space<semaphore_mem>> -> memref<1x!tpu.dma_semaphore, #tpu.memory_space<semaphore_mem>>
        %125 = tpu.memref_squeeze %124 : memref<1x!tpu.dma_semaphore, #tpu.memory_space<semaphore_mem>> -> memref<!tpu.dma_semaphore, #tpu.memory_space<semaphore_mem>>
        tpu.enqueue_dma source(%121 : memref<1x128xf32, #tpu.memory_space<any>>) target(%123 : memref<1x128xf32, #tpu.memory_space<vmem>>) target_semaphore(%125 : memref<!tpu.dma_semaphore, #tpu.memory_space<semaphore_mem>>)
        %c6_i32 = arith.constant 6 : i32
        %126 = arith.addi %71, %c6_i32 : i32
        %127 = arith.addi %68, %126 : i32
        %128 = arith.index_cast %127 : i32 to index
        %129 = memref.load %arg2[%128] : memref<32xi32, #tpu.memory_space<smem>>
        %c0_i32_52 = arith.constant 0 : i32
        %130 = tpu.memref_slice %arg3[%129, %c0_i32_52] : memref<64x128xf32, #tpu.memory_space<any>> -> memref<1x128xf32, #tpu.memory_space<any>>
        %c0_i32_53 = arith.constant 0 : i32
        %131 = tpu.memref_slice %arg8[%11, %126, %c0_i32_53] : memref<2x16x128xf32, #tpu.memory_space<vmem>> -> memref<1x1x128xf32, #tpu.memory_space<vmem>>
        %132 = tpu.memref_squeeze %131 : memref<1x1x128xf32, #tpu.memory_space<vmem>> -> memref<1x128xf32, #tpu.memory_space<vmem>>
        %133 = tpu.memref_slice %arg9[%11] : memref<2x!tpu.dma_semaphore, #tpu.memory_space<semaphore_mem>> -> memref<1x!tpu.dma_semaphore, #tpu.memory_space<semaphore_mem>>
        %134 = tpu.memref_squeeze %133 : memref<1x!tpu.dma_semaphore, #tpu.memory_space<semaphore_mem>> -> memref<!tpu.dma_semaphore, #tpu.memory_space<semaphore_mem>>
        tpu.enqueue_dma source(%130 : memref<1x128xf32, #tpu.memory_space<any>>) target(%132 : memref<1x128xf32, #tpu.memory_space<vmem>>) target_semaphore(%134 : memref<!tpu.dma_semaphore, #tpu.memory_space<semaphore_mem>>)
        %c7_i32 = arith.constant 7 : i32
        %135 = arith.addi %71, %c7_i32 : i32
        %136 = arith.addi %68, %135 : i32
        %137 = arith.index_cast %136 : i32 to index
        %138 = memref.load %arg2[%137] : memref<32xi32, #tpu.memory_space<smem>>
        %c0_i32_54 = arith.constant 0 : i32
        %139 = tpu.memref_slice %arg3[%138, %c0_i32_54] : memref<64x128xf32, #tpu.memory_space<any>> -> memref<1x128xf32, #tpu.memory_space<any>>
        %c0_i32_55 = arith.constant 0 : i32
        %140 = tpu.memref_slice %arg8[%11, %135, %c0_i32_55] : memref<2x16x128xf32, #tpu.memory_space<vmem>> -> memref<1x1x128xf32, #tpu.memory_space<vmem>>
        %141 = tpu.memref_squeeze %140 : memref<1x1x128xf32, #tpu.memory_space<vmem>> -> memref<1x128xf32, #tpu.memory_space<vmem>>
        %142 = tpu.memref_slice %arg9[%11] : memref<2x!tpu.dma_semaphore, #tpu.memory_space<semaphore_mem>> -> memref<1x!tpu.dma_semaphore, #tpu.memory_space<semaphore_mem>>
        %143 = tpu.memref_squeeze %142 : memref<1x!tpu.dma_semaphore, #tpu.memory_space<semaphore_mem>> -> memref<!tpu.dma_semaphore, #tpu.memory_space<semaphore_mem>>
        tpu.enqueue_dma source(%139 : memref<1x128xf32, #tpu.memory_space<any>>) target(%141 : memref<1x128xf32, #tpu.memory_space<vmem>>) target_semaphore(%143 : memref<!tpu.dma_semaphore, #tpu.memory_space<semaphore_mem>>)
      }
      %c2_i32_36 = arith.constant 2 : i32
    } else {
    }
    %c1_i32_7 = arith.constant 1 : i32
    %16 = arith.addi %arg1, %c1_i32_7 : i32
    %c2_i32_8 = arith.constant 2 : i32
    %17 = arith.cmpi slt, %16, %c2_i32_8 : i32
    %18 = arith.extui %17 : i1 to i32
    %c0_i32_9 = arith.constant 0 : i32
    %19 = arith.cmpi ne, %18, %c0_i32_9 : i32
    scf.if %19 {
      %c1_i32_32 = arith.constant 1 : i32
      %67 = arith.addi %1, %c1_i32_32 : i32
      %c16_i32_33 = arith.constant 16 : i32
      %68 = arith.muli %67, %c16_i32_33 : i32
      %69 = tpu.assume_multiple %68, 16 : i32
      %c0_i32_34 = arith.constant 0 : i32
      %c2_i32_35 = arith.constant 2 : i32
      %70 = arith.addi %c0_i32_34, %c2_i32_35 : i32
      %c1_i32_36 = arith.constant 1 : i32
      scf.for %arg10 = %c0_i32_34 to %70 step %c1_i32_36  : i32 {
        %c8_i32 = arith.constant 8 : i32
        %71 = arith.muli %arg10, %c8_i32 : i32
        %72 = tpu.assume_multiple %71, 8 : i32
        %c0_i32_38 = arith.constant 0 : i32
        %73 = arith.addi %72, %c0_i32_38 : i32
        %74 = arith.addi %69, %73 : i32
        %75 = arith.index_cast %74 : i32 to index
        %76 = memref.load %arg2[%75] : memref<32xi32, #tpu.memory_space<smem>>
        %c0_i32_39 = arith.constant 0 : i32
        %77 = tpu.memref_slice %arg3[%76, %c0_i32_39] : memref<64x128xf32, #tpu.memory_space<any>> -> memref<1x128xf32, #tpu.memory_space<any>>
        %c0_i32_40 = arith.constant 0 : i32
        %78 = tpu.memref_slice %arg8[%12, %73, %c0_i32_40] : memref<2x16x128xf32, #tpu.memory_space<vmem>> -> memref<1x1x128xf32, #tpu.memory_space<vmem>>
        %79 = tpu.memref_squeeze %78 : memref<1x1x128xf32, #tpu.memory_space<vmem>> -> memref<1x128xf32, #tpu.memory_space<vmem>>
        %80 = tpu.memref_slice %arg9[%12] : memref<2x!tpu.dma_semaphore, #tpu.memory_space<semaphore_mem>> -> memref<1x!tpu.dma_semaphore, #tpu.memory_space<semaphore_mem>>
        %81 = tpu.memref_squeeze %80 : memref<1x!tpu.dma_semaphore, #tpu.memory_space<semaphore_mem>> -> memref<!tpu.dma_semaphore, #tpu.memory_space<semaphore_mem>>
        tpu.enqueue_dma source(%77 : memref<1x128xf32, #tpu.memory_space<any>>) target(%79 : memref<1x128xf32, #tpu.memory_space<vmem>>) target_semaphore(%81 : memref<!tpu.dma_semaphore, #tpu.memory_space<semaphore_mem>>)
        %c1_i32_41 = arith.constant 1 : i32
        %82 = arith.addi %72, %c1_i32_41 : i32
        %83 = arith.addi %69, %82 : i32
        %84 = arith.index_cast %83 : i32 to index
        %85 = memref.load %arg2[%84] : memref<32xi32, #tpu.memory_space<smem>>
        %c0_i32_42 = arith.constant 0 : i32
        %86 = tpu.memref_slice %arg3[%85, %c0_i32_42] : memref<64x128xf32, #tpu.memory_space<any>> -> memref<1x128xf32, #tpu.memory_space<any>>
        %c0_i32_43 = arith.constant 0 : i32
        %87 = tpu.memref_slice %arg8[%12, %82, %c0_i32_43] : memref<2x16x128xf32, #tpu.memory_space<vmem>> -> memref<1x1x128xf32, #tpu.memory_space<vmem>>
        %88 = tpu.memref_squeeze %87 : memref<1x1x128xf32, #tpu.memory_space<vmem>> -> memref<1x128xf32, #tpu.memory_space<vmem>>
        %89 = tpu.memref_slice %arg9[%12] : memref<2x!tpu.dma_semaphore, #tpu.memory_space<semaphore_mem>> -> memref<1x!tpu.dma_semaphore, #tpu.memory_space<semaphore_mem>>
        %90 = tpu.memref_squeeze %89 : memref<1x!tpu.dma_semaphore, #tpu.memory_space<semaphore_mem>> -> memref<!tpu.dma_semaphore, #tpu.memory_space<semaphore_mem>>
        tpu.enqueue_dma source(%86 : memref<1x128xf32, #tpu.memory_space<any>>) target(%88 : memref<1x128xf32, #tpu.memory_space<vmem>>) target_semaphore(%90 : memref<!tpu.dma_semaphore, #tpu.memory_space<semaphore_mem>>)
        %c2_i32_44 = arith.constant 2 : i32
        %91 = arith.addi %72, %c2_i32_44 : i32
        %92 = arith.addi %69, %91 : i32
        %93 = arith.index_cast %92 : i32 to index
        %94 = memref.load %arg2[%93] : memref<32xi32, #tpu.memory_space<smem>>
        %c0_i32_45 = arith.constant 0 : i32
        %95 = tpu.memref_slice %arg3[%94, %c0_i32_45] : memref<64x128xf32, #tpu.memory_space<any>> -> memref<1x128xf32, #tpu.memory_space<any>>
        %c0_i32_46 = arith.constant 0 : i32
        %96 = tpu.memref_slice %arg8[%12, %91, %c0_i32_46] : memref<2x16x128xf32, #tpu.memory_space<vmem>> -> memref<1x1x128xf32, #tpu.memory_space<vmem>>
        %97 = tpu.memref_squeeze %96 : memref<1x1x128xf32, #tpu.memory_space<vmem>> -> memref<1x128xf32, #tpu.memory_space<vmem>>
        %98 = tpu.memref_slice %arg9[%12] : memref<2x!tpu.dma_semaphore, #tpu.memory_space<semaphore_mem>> -> memref<1x!tpu.dma_semaphore, #tpu.memory_space<semaphore_mem>>
        %99 = tpu.memref_squeeze %98 : memref<1x!tpu.dma_semaphore, #tpu.memory_space<semaphore_mem>> -> memref<!tpu.dma_semaphore, #tpu.memory_space<semaphore_mem>>
        tpu.enqueue_dma source(%95 : memref<1x128xf32, #tpu.memory_space<any>>) target(%97 : memref<1x128xf32, #tpu.memory_space<vmem>>) target_semaphore(%99 : memref<!tpu.dma_semaphore, #tpu.memory_space<semaphore_mem>>)
        %c3_i32 = arith.constant 3 : i32
        %100 = arith.addi %72, %c3_i32 : i32
        %101 = arith.addi %69, %100 : i32
        %102 = arith.index_cast %101 : i32 to index
        %103 = memref.load %arg2[%102] : memref<32xi32, #tpu.memory_space<smem>>
        %c0_i32_47 = arith.constant 0 : i32
        %104 = tpu.memref_slice %arg3[%103, %c0_i32_47] : memref<64x128xf32, #tpu.memory_space<any>> -> memref<1x128xf32, #tpu.memory_space<any>>
        %c0_i32_48 = arith.constant 0 : i32
        %105 = tpu.memref_slice %arg8[%12, %100, %c0_i32_48] : memref<2x16x128xf32, #tpu.memory_space<vmem>> -> memref<1x1x128xf32, #tpu.memory_space<vmem>>
        %106 = tpu.memref_squeeze %105 : memref<1x1x128xf32, #tpu.memory_space<vmem>> -> memref<1x128xf32, #tpu.memory_space<vmem>>
        %107 = tpu.memref_slice %arg9[%12] : memref<2x!tpu.dma_semaphore, #tpu.memory_space<semaphore_mem>> -> memref<1x!tpu.dma_semaphore, #tpu.memory_space<semaphore_mem>>
        %108 = tpu.memref_squeeze %107 : memref<1x!tpu.dma_semaphore, #tpu.memory_space<semaphore_mem>> -> memref<!tpu.dma_semaphore, #tpu.memory_space<semaphore_mem>>
        tpu.enqueue_dma source(%104 : memref<1x128xf32, #tpu.memory_space<any>>) target(%106 : memref<1x128xf32, #tpu.memory_space<vmem>>) target_semaphore(%108 : memref<!tpu.dma_semaphore, #tpu.memory_space<semaphore_mem>>)
        %c4_i32 = arith.constant 4 : i32
        %109 = arith.addi %72, %c4_i32 : i32
        %110 = arith.addi %69, %109 : i32
        %111 = arith.index_cast %110 : i32 to index
        %112 = memref.load %arg2[%111] : memref<32xi32, #tpu.memory_space<smem>>
        %c0_i32_49 = arith.constant 0 : i32
        %113 = tpu.memref_slice %arg3[%112, %c0_i32_49] : memref<64x128xf32, #tpu.memory_space<any>> -> memref<1x128xf32, #tpu.memory_space<any>>
        %c0_i32_50 = arith.constant 0 : i32
        %114 = tpu.memref_slice %arg8[%12, %109, %c0_i32_50] : memref<2x16x128xf32, #tpu.memory_space<vmem>> -> memref<1x1x128xf32, #tpu.memory_space<vmem>>
        %115 = tpu.memref_squeeze %114 : memref<1x1x128xf32, #tpu.memory_space<vmem>> -> memref<1x128xf32, #tpu.memory_space<vmem>>
        %116 = tpu.memref_slice %arg9[%12] : memref<2x!tpu.dma_semaphore, #tpu.memory_space<semaphore_mem>> -> memref<1x!tpu.dma_semaphore, #tpu.memory_space<semaphore_mem>>
        %117 = tpu.memref_squeeze %116 : memref<1x!tpu.dma_semaphore, #tpu.memory_space<semaphore_mem>> -> memref<!tpu.dma_semaphore, #tpu.memory_space<semaphore_mem>>
        tpu.enqueue_dma source(%113 : memref<1x128xf32, #tpu.memory_space<any>>) target(%115 : memref<1x128xf32, #tpu.memory_space<vmem>>) target_semaphore(%117 : memref<!tpu.dma_semaphore, #tpu.memory_space<semaphore_mem>>)
        %c5_i32 = arith.constant 5 : i32
        %118 = arith.addi %72, %c5_i32 : i32
        %119 = arith.addi %69, %118 : i32
        %120 = arith.index_cast %119 : i32 to index
        %121 = memref.load %arg2[%120] : memref<32xi32, #tpu.memory_space<smem>>
        %c0_i32_51 = arith.constant 0 : i32
        %122 = tpu.memref_slice %arg3[%121, %c0_i32_51] : memref<64x128xf32, #tpu.memory_space<any>> -> memref<1x128xf32, #tpu.memory_space<any>>
        %c0_i32_52 = arith.constant 0 : i32
        %123 = tpu.memref_slice %arg8[%12, %118, %c0_i32_52] : memref<2x16x128xf32, #tpu.memory_space<vmem>> -> memref<1x1x128xf32, #tpu.memory_space<vmem>>
        %124 = tpu.memref_squeeze %123 : memref<1x1x128xf32, #tpu.memory_space<vmem>> -> memref<1x128xf32, #tpu.memory_space<vmem>>
        %125 = tpu.memref_slice %arg9[%12] : memref<2x!tpu.dma_semaphore, #tpu.memory_space<semaphore_mem>> -> memref<1x!tpu.dma_semaphore, #tpu.memory_space<semaphore_mem>>
        %126 = tpu.memref_squeeze %125 : memref<1x!tpu.dma_semaphore, #tpu.memory_space<semaphore_mem>> -> memref<!tpu.dma_semaphore, #tpu.memory_space<semaphore_mem>>
        tpu.enqueue_dma source(%122 : memref<1x128xf32, #tpu.memory_space<any>>) target(%124 : memref<1x128xf32, #tpu.memory_space<vmem>>) target_semaphore(%126 : memref<!tpu.dma_semaphore, #tpu.memory_space<semaphore_mem>>)
        %c6_i32 = arith.constant 6 : i32
        %127 = arith.addi %72, %c6_i32 : i32
        %128 = arith.addi %69, %127 : i32
        %129 = arith.index_cast %128 : i32 to index
        %130 = memref.load %arg2[%129] : memref<32xi32, #tpu.memory_space<smem>>
        %c0_i32_53 = arith.constant 0 : i32
        %131 = tpu.memref_slice %arg3[%130, %c0_i32_53] : memref<64x128xf32, #tpu.memory_space<any>> -> memref<1x128xf32, #tpu.memory_space<any>>
        %c0_i32_54 = arith.constant 0 : i32
        %132 = tpu.memref_slice %arg8[%12, %127, %c0_i32_54] : memref<2x16x128xf32, #tpu.memory_space<vmem>> -> memref<1x1x128xf32, #tpu.memory_space<vmem>>
        %133 = tpu.memref_squeeze %132 : memref<1x1x128xf32, #tpu.memory_space<vmem>> -> memref<1x128xf32, #tpu.memory_space<vmem>>
        %134 = tpu.memref_slice %arg9[%12] : memref<2x!tpu.dma_semaphore, #tpu.memory_space<semaphore_mem>> -> memref<1x!tpu.dma_semaphore, #tpu.memory_space<semaphore_mem>>
        %135 = tpu.memref_squeeze %134 : memref<1x!tpu.dma_semaphore, #tpu.memory_space<semaphore_mem>> -> memref<!tpu.dma_semaphore, #tpu.memory_space<semaphore_mem>>
        tpu.enqueue_dma source(%131 : memref<1x128xf32, #tpu.memory_space<any>>) target(%133 : memref<1x128xf32, #tpu.memory_space<vmem>>) target_semaphore(%135 : memref<!tpu.dma_semaphore, #tpu.memory_space<semaphore_mem>>)
        %c7_i32 = arith.constant 7 : i32
        %136 = arith.addi %72, %c7_i32 : i32
        %137 = arith.addi %69, %136 : i32
        %138 = arith.index_cast %137 : i32 to index
        %139 = memref.load %arg2[%138] : memref<32xi32, #tpu.memory_space<smem>>
        %c0_i32_55 = arith.constant 0 : i32
        %140 = tpu.memref_slice %arg3[%139, %c0_i32_55] : memref<64x128xf32, #tpu.memory_space<any>> -> memref<1x128xf32, #tpu.memory_space<any>>
        %c0_i32_56 = arith.constant 0 : i32
        %141 = tpu.memref_slice %arg8[%12, %136, %c0_i32_56] : memref<2x16x128xf32, #tpu.memory_space<vmem>> -> memref<1x1x128xf32, #tpu.memory_space<vmem>>
        %142 = tpu.memref_squeeze %141 : memref<1x1x128xf32, #tpu.memory_space<vmem>> -> memref<1x128xf32, #tpu.memory_space<vmem>>
        %143 = tpu.memref_slice %arg9[%12] : memref<2x!tpu.dma_semaphore, #tpu.memory_space<semaphore_mem>> -> memref<1x!tpu.dma_semaphore, #tpu.memory_space<semaphore_mem>>
        %144 = tpu.memref_squeeze %143 : memref<1x!tpu.dma_semaphore, #tpu.memory_space<semaphore_mem>> -> memref<!tpu.dma_semaphore, #tpu.memory_space<semaphore_mem>>
        tpu.enqueue_dma source(%140 : memref<1x128xf32, #tpu.memory_space<any>>) target(%142 : memref<1x128xf32, #tpu.memory_space<vmem>>) target_semaphore(%144 : memref<!tpu.dma_semaphore, #tpu.memory_space<semaphore_mem>>)
      }
      %c2_i32_37 = arith.constant 2 : i32
    } else {
    }
    %c0_i32_10 = arith.constant 0 : i32
    %c0_i32_11 = arith.constant 0 : i32
    %20 = tpu.memref_slice %arg8[%11, %c0_i32_10, %c0_i32_11] : memref<2x16x128xf32, #tpu.memory_space<vmem>> -> memref<1x16x128xf32, #tpu.memory_space<vmem>>
    %21 = tpu.memref_squeeze %20 : memref<1x16x128xf32, #tpu.memory_space<vmem>> -> memref<16x128xf32, #tpu.memory_space<vmem>>
    %c0_i32_12 = arith.constant 0 : i32
    %c0_i32_13 = arith.constant 0 : i32
    %22 = tpu.memref_slice %arg8[%11, %c0_i32_12, %c0_i32_13] : memref<2x16x128xf32, #tpu.memory_space<vmem>> -> memref<1x16x128xf32, #tpu.memory_space<vmem>>
    %23 = tpu.memref_squeeze %22 : memref<1x16x128xf32, #tpu.memory_space<vmem>> -> memref<16x128xf32, #tpu.memory_space<vmem>>
    %24 = tpu.memref_slice %arg9[%11] : memref<2x!tpu.dma_semaphore, #tpu.memory_space<semaphore_mem>> -> memref<1x!tpu.dma_semaphore, #tpu.memory_space<semaphore_mem>>
    %25 = tpu.memref_squeeze %24 : memref<1x!tpu.dma_semaphore, #tpu.memory_space<semaphore_mem>> -> memref<!tpu.dma_semaphore, #tpu.memory_space<semaphore_mem>>
    tpu.wait_dma2 semaphore(%25 : memref<!tpu.dma_semaphore, #tpu.memory_space<semaphore_mem>>) src(%21 : memref<16x128xf32, #tpu.memory_space<vmem>>) dst(%23 : memref<16x128xf32, #tpu.memory_space<vmem>>)
    %c1_i32_14 = arith.constant 1 : i32
    %c0_i32_15 = arith.constant 0 : i32
    %26 = arith.cmpi eq, %c1_i32_14, %c0_i32_15 : i32
    %c1_i32_16 = arith.constant 1 : i32
    %27 = arith.select %26, %c1_i32_16, %c1_i32_14 : i32
    %28 = arith.remsi %1, %27 : i32
    %c0_i32_17 = arith.constant 0 : i32
    %29 = arith.cmpi ne, %28, %c0_i32_17 : i32
    %c0_i32_18 = arith.constant 0 : i32
    %30 = arith.cmpi slt, %28, %c0_i32_18 : i32
    %c0_i32_19 = arith.constant 0 : i32
    %31 = arith.cmpi slt, %27, %c0_i32_19 : i32
    %32 = arith.xori %30, %31 : i1
    %33 = arith.andi %32, %29 : i1
    %34 = arith.addi %28, %27 : i32
    %35 = arith.select %33, %34, %28 : i32
    %c16_i32 = arith.constant 16 : i32
    %36 = arith.muli %35, %c16_i32 : i32
    %37 = tpu.assume_multiple %36, 16 : i32
    %38 = arith.index_cast %37 : i32 to index
    %c0 = arith.constant 0 : index
    %39 = vector.load %arg4[%38, %c0] : memref<16x128xf32, #tpu.memory_space<vmem>>, vector<16x128xf32>
    %40 = arith.index_cast %11 : i32 to index
    %c0_20 = arith.constant 0 : index
    %c0_21 = arith.constant 0 : index
    %41 = vector.load %arg8[%40, %c0_20, %c0_21] : memref<2x16x128xf32, #tpu.memory_space<vmem>>, vector<1x16x128xf32>
    %42 = vector.shape_cast %41 : vector<1x16x128xf32> to vector<16x128xf32>
    %43 = arith.addf %42, %39 : vector<16x128xf32>
    %cst = arith.constant dense<0.000000e+00> : vector<16xf32>
    %44 = vector.multi_reduction <add>, %43, %cst [1] : vector<16x128xf32> to vector<16xf32>
    %45 = vector.shape_cast %44 : vector<16xf32> to vector<16x1xf32>
    %cst_22 = arith.constant 1.280000e+02 : f32
    %46 = vector.broadcast %cst_22 : f32 to vector<16x1xf32>
    %47 = arith.divf %45, %46 : vector<16x1xf32>
    %48 = vector.broadcast %47 : vector<16x1xf32> to vector<16x128xf32>
    %49 = arith.subf %43, %48 : vector<16x128xf32>
    %50 = arith.mulf %49, %49 : vector<16x128xf32>
    %cst_23 = arith.constant dense<0.000000e+00> : vector<16xf32>
    %51 = vector.multi_reduction <add>, %50, %cst_23 [1] : vector<16x128xf32> to vector<16xf32>
    %52 = vector.shape_cast %51 : vector<16xf32> to vector<16x1xf32>
    %cst_24 = arith.constant 1.280000e+02 : f32
    %53 = vector.broadcast %cst_24 : f32 to vector<16x1xf32>
    %54 = arith.divf %52, %53 : vector<16x1xf32>
    %c0_25 = arith.constant 0 : index
    %c0_26 = arith.constant 0 : index
    %55 = vector.load %arg5[%c0_25, %c0_26] : memref<1x128xf32, #tpu.memory_space<vmem>>, vector<1x128xf32>
    %cst_27 = arith.constant 9.99999996E-13 : f32
    %56 = vector.broadcast %cst_27 : f32 to vector<16x1xf32>
    %57 = arith.addf %54, %56 : vector<16x1xf32>
    %58 = math.rsqrt %57 : vector<16x1xf32>
    %59 = vector.broadcast %55 : vector<1x128xf32> to vector<16x128xf32>
    %60 = vector.broadcast %58 : vector<16x1xf32> to vector<16x128xf32>
    %61 = arith.mulf %59, %60 : vector<16x128xf32>
    %62 = arith.mulf %49, %61 : vector<16x128xf32>
    %c0_28 = arith.constant 0 : index
    %c0_29 = arith.constant 0 : index
    %63 = vector.load %arg6[%c0_28, %c0_29] : memref<1x128xf32, #tpu.memory_space<vmem>>, vector<1x128xf32>
    %64 = vector.broadcast %63 : vector<1x128xf32> to vector<16x128xf32>
    %65 = arith.addf %62, %64 : vector<16x128xf32>
    %c0_30 = arith.constant 0 : index
    %c0_31 = arith.constant 0 : index
    %66 = vector.load %arg7[%c0_30, %c0_31] : memref<16x128xf32, #tpu.memory_space<vmem>>, vector<16x128xf32>
    tpu.vector_store %arg7[%c0_30, %c0_31], %65 {strides = array<i32>} : memref<16x128xf32, #tpu.memory_space<vmem>>, vector<16x128xf32>,
    return
  }
  func.func @transform_1(%arg0: i32, %arg1: i32, %arg2: memref<32xi32, #tpu.memory_space<smem>>) -> (i32, i32) {
    %c0_i32 = arith.constant 0 : i32
    %c0_i32_0 = arith.constant 0 : i32
    %c0_i32_1 = arith.constant 0 : i32
    return %c0_i32, %c0_i32_0 : i32, i32
  }
  func.func @transform_2(%arg0: i32, %arg1: i32, %arg2: memref<32xi32, #tpu.memory_space<smem>>) -> (i32, i32) {
    %c0_i32 = arith.constant 0 : i32
    %c0_i32_0 = arith.constant 0 : i32
    %c0_i32_1 = arith.constant 0 : i32
    return %c0_i32, %c0_i32_0 : i32, i32
  }
  func.func @transform_3(%arg0: i32, %arg1: i32, %arg2: memref<32xi32, #tpu.memory_space<smem>>) -> (i32, i32) {
    %c0_i32 = arith.constant 0 : i32
    %c0_i32_0 = arith.constant 0 : i32
    %c0_i32_1 = arith.constant 0 : i32
    return %c0_i32, %c0_i32_0 : i32, i32
  }
  func.func @transform_4(%arg0: i32, %arg1: i32, %arg2: memref<32xi32, #tpu.memory_space<smem>>) -> (i32, i32) {
    %c2_i32 = arith.constant 2 : i32
    %0 = arith.muli %arg0, %c2_i32 : i32
    %1 = arith.addi %0, %arg1 : i32
    %c0_i32 = arith.constant 0 : i32
    %c0_i32_0 = arith.constant 0 : i32
    return %1, %c0_i32 : i32, i32
  }
}

</mosaic_0001>

<llo_original>
// kernel: tpu_custom_call.1
$region0: #{tpu_custom_call.1}
  #allocation0 [shape = 'u32[]', space=smem, size = 0x4, offset = 0x4, fixed_abs, tag = 'smem constant byte address 0x4 - core index']
  #allocation1 [shape = 'u32[72,128]{1,0:T(1,128)}', space=vmem, size = 0x9000, scoped, tag = 'internal scratch']
  #allocation2 [shape = 'f32[2,16,128]{2,1,0:T(8,128)}', space=vmem, size = 0x4000, scoped, tag = 'scratch operand']
  #allocation3 [shape = 's32[2]{0}', space=sflag, size = 0x8, scoped, tag = 'scratch operand']
  #allocation4 [shape = 's32[1]{0}', space=sflag, size = 0x4, scoped, tag = 'scoped memory for tpu_custom_call.1']
  #allocation5 [shape = 'u8[512]{0}', space=smem, size = 0x200, scoped, tag = 'prefetched SMEM operand 0']
  #allocation10 [shape = 's32[]', space=sflag, size = 0x4, offset = 0, fixed_abs, tag = 'sflag constant byte address 0x0 - dummy sync flag']
  #allocation11 [shape = 's32[]', space=sflag, size = 0x4, offset = 0, fixed_abs, tag = 'sflag constant byte address 0x0 - dummy sync flag']
  #allocation12 [shape = 'u32[]', space=smem, size = 0x4, offset = 0x44, fixed_abs, tag = 'smem constant byte address 0x44 - assertion arg 0']
  #allocation13 [shape = 'u32[]', space=smem, size = 0x4, offset = 0x48, fixed_abs, tag = 'smem constant byte address 0x48 - assertion arg 1']
  #allocation14 [shape = 's32[]', space=sflag, size = 0x4, offset = 0, fixed_abs, tag = 'sflag constant byte address 0x0 - dummy sync flag']
  #allocation15 [shape = 's32[]', space=sflag, size = 0x4, offset = 0, fixed_abs, tag = 'sflag constant byte address 0x0 - dummy sync flag']
  #allocation16 [shape = 's32[]', space=sflag, size = 0x4, offset = 0, fixed_abs, tag = 'sflag constant byte address 0x0 - dummy sync flag']
  #allocation17 [shape = 's32[]', space=sflag, size = 0x4, offset = 0, fixed_abs, tag = 'sflag constant byte address 0x0 - dummy sync flag']
  #allocation18 [shape = 's32[]', space=sflag, size = 0x4, offset = 0, fixed_abs, tag = 'sflag constant byte address 0x0 - dummy sync flag']
  #allocation19 [shape = 's32[]', space=sflag, size = 0x4, offset = 0, fixed_abs, tag = 'sflag constant byte address 0x0 - dummy sync flag']
  #allocation20 [shape = 's32[]', space=sflag, size = 0x4, offset = 0, fixed_abs, tag = 'sflag constant byte address 0x0 - dummy sync flag']
  #allocation21 [shape = 's32[]', space=sflag, size = 0x4, offset = 0, fixed_abs, tag = 'sflag constant byte address 0x0 - dummy sync flag']
  #allocation22 [shape = 's32[]', space=sflag, size = 0x4, offset = 0, fixed_abs, tag = 'sflag constant byte address 0x0 - dummy sync flag']
  #allocation23 [shape = 's32[]', space=sflag, size = 0x4, offset = 0, fixed_abs, tag = 'sflag constant byte address 0x0 - dummy sync flag']
  #allocation24 [shape = 's32[]', space=sflag, size = 0x4, offset = 0, fixed_abs, tag = 'sflag constant byte address 0x0 - dummy sync flag']
  #allocation25 [shape = 's32[]', space=sflag, size = 0x4, offset = 0, fixed_abs, tag = 'sflag constant byte address 0x0 - dummy sync flag']
  #allocation26 [shape = 's32[]', space=sflag, size = 0x4, offset = 0, fixed_abs, tag = 'sflag constant byte address 0x0 - dummy sync flag']
  #allocation27 [shape = 's32[]', space=sflag, size = 0x4, offset = 0, fixed_abs, tag = 'sflag constant byte address 0x0 - dummy sync flag']
  #allocation28 [shape = 's32[]', space=sflag, size = 0x4, offset = 0, fixed_abs, tag = 'sflag constant byte address 0x0 - dummy sync flag']
  #allocation29 [shape = 's32[]', space=sflag, size = 0x4, offset = 0, fixed_abs, tag = 'sflag constant byte address 0x0 - dummy sync flag']
  #allocation30 [shape = 's32[]', space=sflag, size = 0x4, offset = 0, fixed_abs, tag = 'sflag constant byte address 0x0 - dummy sync flag']
  #allocation31 [shape = 's32[]', space=sflag, size = 0x4, offset = 0, fixed_abs, tag = 'sflag constant byte address 0x0 - dummy sync flag']
  #allocation32 [shape = 's32[]', space=sflag, size = 0x4, offset = 0, fixed_abs, tag = 'sflag constant byte address 0x0 - dummy sync flag']
  #allocation33 [shape = 's32[]', space=sflag, size = 0x4, offset = 0, fixed_abs, tag = 'sflag constant byte address 0x0 - dummy sync flag']
  #allocation34 [shape = 's32[]', space=sflag, size = 0x4, offset = 0, fixed_abs, tag = 'sflag constant byte address 0x0 - dummy sync flag']
  #allocation35 [shape = 's32[]', space=sflag, size = 0x4, offset = 0, fixed_abs, tag = 'sflag constant byte address 0x0 - dummy sync flag']
  #allocation36 [shape = 's32[]', space=sflag, size = 0x4, offset = 0, fixed_abs, tag = 'sflag constant byte address 0x0 - dummy sync flag']
  #allocation37 [shape = 's32[]', space=sflag, size = 0x4, offset = 0, fixed_abs, tag = 'sflag constant byte address 0x0 - dummy sync flag']
  #allocation38 [shape = 's32[]', space=sflag, size = 0x4, offset = 0, fixed_abs, tag = 'sflag constant byte address 0x0 - dummy sync flag']
  #allocation39 [shape = 's32[]', space=sflag, size = 0x4, offset = 0, fixed_abs, tag = 'sflag constant byte address 0x0 - dummy sync flag']
  #allocation40 [shape = 's32[]', space=sflag, size = 0x4, offset = 0, fixed_abs, tag = 'sflag constant byte address 0x0 - dummy sync flag']
  #allocation41 [shape = 's32[]', space=sflag, size = 0x4, offset = 0, fixed_abs, tag = 'sflag constant byte address 0x0 - dummy sync flag']
  #allocation42 [shape = 's32[]', space=sflag, size = 0x4, offset = 0, fixed_abs, tag = 'sflag constant byte address 0x0 - dummy sync flag']
  #allocation43 [shape = 's32[]', space=sflag, size = 0x4, offset = 0, fixed_abs, tag = 'sflag constant byte address 0x0 - dummy sync flag']
  %s0 = inlined_call_operand.hbm [shape: s32[32], index: 0, kind: input, shape index: {}]
  %s1 = inlined_call_operand.hbm [shape: f32[64,128], index: 1, kind: input, shape index: {}]
  %s2 = inlined_call_operand.hbm [shape: f32[16,128], index: 2, kind: input, shape index: {}]
  %s3 = inlined_call_operand.vmem [shape: f32[1,128], index: 3, kind: input, shape index: {}]
  %s4 = inlined_call_operand.vmem [shape: f32[1,128], index: 4, kind: input, shape index: {}]
  %s5 = inlined_call_operand.hbm [shape: f32[32,128], index: 5, kind: output, shape index: {}]
  %s6 = sld [smem:[#allocation0]]
  $region135: #{tpu_custom_call.1} parent=0
    _
  %s8 = ssub.s32 1, %s6
  %s9 = scalar_select 0, %s8, %s6
  %s11 = sshll.u32 %s0, 4
  %s12 = int_to_ptr.hbm [resolvable:$true] %s11
  %14 = dma.hbm_to_smem %s12, 16, [#allocation5], [#allocation4]
  %16 = dma.done [#allocation4], 16
  %17 = sfence
  $region1: #{tpu_custom_call.1} parent=0
    #allocation6 [shape = 'u8[8192]{0}', space=vmem, size = 0x2000, scoped, tag = 'input window, operand 2, single buffered']
    #allocation7 [shape = 's32[2]{0}', space=sflag, size = 0x8, scoped, tag = 'scoped memory for tpu_custom_call.1']
    #allocation8 [shape = 's32[2]{0}', space=sflag, size = 0x8, scoped, tag = 'scoped memory for tpu_custom_call.1']
    #allocation9 [shape = 'u8[16384]{0}', space=vmem, size = 0x4000, scoped, tag = 'output window, operand 0']
    %18 = vsyncpa [#allocation7], 0
    %19 = vsyncpa [#allocation8], 0
    %s20 = scalar_lea.sflag [#allocation8], 1
    %21 = vsyncpa %s20, 0
    loop: start=0, step=1, limit=4
    $region2: #{tpu_custom_call.1} parent=1 // loop_pre_header
      _
    $region3: #{tpu_custom_call.1} parent=1 // loop_header
      %s23 = sphi 0, %s27
      %p24 = scmp.ge.s32.totalorder %s23, 4
      %s30 = sphi 0, %s42
      %s31 = sphi 0, %s38
      %s32 = sphi 0, %s30
      %s33 = sphi 0, %s31
      %s34 = sphi 0, %s32
      %s35 = sphi 0, %s33
      %s43 = sphi 0, %s43
      %s45 = sphi 0, %s43
      %s46 = sphi 0, %s45
      %s60 = sphi 0, %s46
      %s64 = sphi 0, %s64
      %s66 = sphi 0, %s64
      %s67 = sphi 0, %s66
      %s81 = sphi 0, %s67
      %s85 = sphi 0, %s85
      %s87 = sphi 0, %s85
      %s88 = sphi 0, %s87
      %s102 = sphi 0, %s88
      %s112 = sphi 0, %s114
      %s115 = sphi 0, %s112
      %s116 = sphi 0, %s115
      %s132 = sphi 0, %s116
    $region4: #{tpu_custom_call.1} parent=1 // loop_header_branch
      %26 = sbr.rel (%p24) target = $region8
    $region5: #{tpu_custom_call.1} parent=1 // loop_body
      %s28 = ssub.s32 %s23, 1
      %s29 = ssub.s32 %s23, 2
      %s36 = sadd.s32 1, %s31
      %p37 = scmp.ge.s32.totalorder %s36, 2
      %s38 = scalar_select %p37, 0, %s36
      %s39 = sadd.s32 1, %s30
      %s40 = scalar_select %p37, %s39, %s30
      %p41 = scmp.ge.s32.totalorder %s40, 1
      %s42 = scalar_select %p41, 0, %s40
      %s44 = sadd.s32 %s43, 1
      %p47 = scmp.eq.s32.totalorder %s23, 1
      %p48 = scmp.ne.s32.totalorder %s43, %s45
      %p49 = scmp.eq.s32.totalorder %s23, 0
      %p50 = por %p48, %p49
      %p51 = scmp.ne.s32.totalorder %s43, %s45
      %p52 = scmp.eq.s32.totalorder %s28, 1
      %p53 = por %p51, %p52
      %p54 = scmp.ne.s32.totalorder %s45, %s46
      %p55 = scmp.eq.s32.totalorder %s28, 0
      %p56 = por %p54, %p55
      %p57 = scmp.ne.s32.totalorder %s45, %s46
      %p58 = scmp.eq.s32.totalorder %s29, 1
      %p59 = por %p57, %p58
      %p61 = scmp.ne.s32.totalorder %s46, %s60
      %p62 = scmp.eq.s32.totalorder %s29, 0
      %p63 = por %p61, %p62
      %s65 = sadd.s32 %s64, 1
      %p68 = scmp.eq.s32.totalorder %s23, 1
      %p69 = scmp.ne.s32.totalorder %s64, %s66
      %p70 = scmp.eq.s32.totalorder %s23, 0
      %p71 = por %p69, %p70
      %p72 = scmp.ne.s32.totalorder %s64, %s66
      %p73 = scmp.eq.s32.totalorder %s28, 1
      %p74 = por %p72, %p73
      %p75 = scmp.ne.s32.totalorder %s66, %s67
      %p76 = scmp.eq.s32.totalorder %s28, 0
      %p77 = por %p75, %p76
      %p78 = scmp.ne.s32.totalorder %s66, %s67
      %p79 = scmp.eq.s32.totalorder %s29, 1
      %p80 = por %p78, %p79
      %p82 = scmp.ne.s32.totalorder %s67, %s81
      %p83 = scmp.eq.s32.totalorder %s29, 0
      %p84 = por %p82, %p83
      %s86 = sadd.s32 %s85, 1
      %p89 = scmp.eq.s32.totalorder %s23, 1
      %p90 = scmp.ne.s32.totalorder %s85, %s87
      %p91 = scmp.eq.s32.totalorder %s23, 0
      %p92 = por %p90, %p91
      %p93 = scmp.ne.s32.totalorder %s85, %s87
      %p94 = scmp.eq.s32.totalorder %s28, 1
      %p95 = por %p93, %p94
      %p96 = scmp.ne.s32.totalorder %s87, %s88
      %p97 = scmp.eq.s32.totalorder %s28, 0
      %p98 = por %p96, %p97
      %p99 = scmp.ne.s32.totalorder %s87, %s88
      %p100 = scmp.eq.s32.totalorder %s29, 1
      %p101 = por %p99, %p100
      %p103 = scmp.ne.s32.totalorder %s88, %s102
      %p104 = scmp.eq.s32.totalorder %s29, 0
      %p105 = por %p103, %p104
      %s106 = smul.u32 %s30, 2
      %s107 = sadd.s32 %s106, %s31
      %s108 = smul.u32 %s42, 2
      %s109 = sadd.s32 %s108, %s38
      %s110 = ssub.s32 %s107, %s109
      %p111 = scmp.eq.s32.totalorder %s110, 0
      %s113 = sadd.s32 %s112, 1
      %s114 = scalar_select %p111, %s112, %s113
      %p117 = pneg %p111
      %p118 = scmp.eq.s32.totalorder %s23, 1
      %p119 = por %p117, %p118
      %p120 = scmp.ne.s32.totalorder %s112, %s115
      %p121 = scmp.eq.s32.totalorder %s23, 0
      %p122 = por %p120, %p121
      %p123 = scmp.ne.s32.totalorder %s112, %s115
      %p124 = scmp.eq.s32.totalorder %s28, 1
      %p125 = por %p123, %p124
      %p126 = scmp.ne.s32.totalorder %s115, %s116
      %p127 = scmp.eq.s32.totalorder %s28, 0
      %p128 = por %p126, %p127
      %p129 = scmp.ne.s32.totalorder %s115, %s116
      %p130 = scmp.eq.s32.totalorder %s29, 1
      %p131 = por %p129, %p130
      %p133 = scmp.ne.s32.totalorder %s116, %s132
      %p134 = scmp.eq.s32.totalorder %s29, 0
      %p135 = por %p133, %p134
      %p136 = scmp.le.s32.totalorder 1, %s23
      %p137 = scmp.lt.s32.totalorder %s23, 3
      %p138 = pnand %p136, %p137
      %p139 = pneg %p138
      // Predicated region
      $region9: #{tpu_custom_call.1} parent=5 // pred_check
        _
      $region10: #{tpu_custom_call.1} parent=5 // pred_check_branch
        %141 = sbr.rel (%p138) target = $region12
      $region11: #{tpu_custom_call.1} parent=5 // pred_region
        %s142 = ssub.s32 %s23, 1
        // Predicated region
        $region13: #{tpu_custom_call.1} parent=11 // pred_check
          %p143 = pneg %p56
        $region14: #{tpu_custom_call.1} parent=11 // pred_check_branch
          %145 = sbr.rel (%p143) target = $region16
        $region15: #{tpu_custom_call.1} parent=11 // pred_region
          %147 = vsyncadd [#allocation7], 0
          %s148 = sshll.u32 %s2, 4
          %s149 = int_to_ptr.hbm [resolvable:$true] %s148
          %s150 = sshll.u32 [#allocation6], 4
          %s151 = int_to_ptr.vmem [resolvable:$true] %s150
          %156 = dma.hbm_to_vmem [thread:$0]  %s149, 256, %s151, [#allocation7], 128, 128, 8
        $region16: #{tpu_custom_call.1} parent=11 // pred_fallthru
          _
        // Predicated region
        $region17: #{tpu_custom_call.1} parent=11 // pred_check
          %p157 = pneg %p77
        $region18: #{tpu_custom_call.1} parent=11 // pred_check_branch
          %159 = sbr.rel (%p157) target = $region20
        $region19: #{tpu_custom_call.1} parent=11 // pred_region
          _
        $region20: #{tpu_custom_call.1} parent=11 // pred_fallthru
          _
        // Predicated region
        $region21: #{tpu_custom_call.1} parent=11 // pred_check
          %p160 = pneg %p98
        $region22: #{tpu_custom_call.1} parent=11 // pred_check_branch
          %162 = sbr.rel (%p160) target = $region24
        $region23: #{tpu_custom_call.1} parent=11 // pred_region
          _
        $region24: #{tpu_custom_call.1} parent=11 // pred_fallthru
          _
      $region12: #{tpu_custom_call.1} parent=5 // pred_fallthru
        _
      %p163 = scmp.lt.s32.totalorder %s23, 2
      // Predicated region
      $region25: #{tpu_custom_call.1} parent=5 // pred_check
        %p164 = pneg %p163
      $region26: #{tpu_custom_call.1} parent=5 // pred_check_branch
        %166 = sbr.rel (%p164) target = $region28
      $region27: #{tpu_custom_call.1} parent=5 // pred_region
        _
      $region28: #{tpu_custom_call.1} parent=5 // pred_fallthru
        _
      %p167 = scmp.le.s32.totalorder 1, %s23
      %p168 = scmp.lt.s32.totalorder %s23, 3
      %p169 = pnand %p167, %p168
      %p170 = pneg %p169
      // Predicated region
      $region29: #{tpu_custom_call.1} parent=5 // pred_check
        _
      $region30: #{tpu_custom_call.1} parent=5 // pred_check_branch
        %172 = sbr.rel (%p169) target = $region32
      $region31: #{tpu_custom_call.1} parent=5 // pred_region
        %s173 = ssub.s32 %s23, 1
        // Predicated region
        $region33: #{tpu_custom_call.1} parent=31 // pred_check
          %p174 = pneg %p56
        $region34: #{tpu_custom_call.1} parent=31 // pred_check_branch
          %176 = sbr.rel (%p174) target = $region36
        $region35: #{tpu_custom_call.1} parent=31 // pred_region
          %178 = dma.done [#allocation7], 256
        $region36: #{tpu_custom_call.1} parent=31 // pred_fallthru
          _
        %p179 = pneg %p56
        %p180 = pneg %p53
        %p181 = pneg %p77
        %p182 = pneg %p74
        %p183 = pneg %p98
        %p184 = pneg %p95
        %p185 = pneg %p128
        %p186 = pneg %p125
        %s187 = sand.u32 %s115, 1
        %s188 = scalar_lea.sflag [#allocation8], %s187
        %s189 = sand.u32 %s115, 1
        %s190 = smul.addr %s189, 16
        %s191 = scalar_lea.vmem [#allocation9], %s190
        %s192 = smul.u32 %s32, 2
        %s193 = sadd.s32 %s192, %s33
        %s194 = smul.u32 2, %s193
        %s195 = smul.u32 %s32, 2
        %s196 = sadd.s32 %s195, %s33
        %p197 = scmp.lt.s32.totalorder %s33, 0
        %s198 = ssub.s32 0, %s33
        %s199 = scalar_select %p197, %s198, %s33
        %s200 = sand.u32 %s199, 1
        %s201 = ssub.s32 0, %s200
        %s202 = scalar_select %p197, %s201, %s200
        %p203 = scmp.ne.s32.totalorder %s202, 0
        %p204 = scmp.lt.s32.totalorder %s202, 0
        %p205 = pnand %p204, %p203
        %p206 = pneg %p205
        %s207 = sadd.s32 %s202, 2
        %s208 = scalar_select %p206, %s207, %s202
        %s209 = ssub.s32 1, %s208
        %p210 = scmp.eq.s32.totalorder %s33, 0
        // Predicated region
        $region37: #{tpu_custom_call.1} parent=31 // pred_check
          %p211 = pneg %p210
        $region38: #{tpu_custom_call.1} parent=31 // pred_check_branch
          %213 = sbr.rel (%p211) target = $region40
        $region39: #{tpu_custom_call.1} parent=31 // pred_region
          %s214 = smul.u32 %s196, 16
          loop: start=0, step=1, limit=2
          $region41: #{tpu_custom_call.1} parent=39 // loop_pre_header
            _
          $region42: #{tpu_custom_call.1} parent=39 // loop_header
            %s216 = sphi 0, %s220
            %p217 = scmp.ge.s32.totalorder %s216, 2
          $region43: #{tpu_custom_call.1} parent=39 // loop_header_branch
            %219 = sbr.rel (%p217) target = $region47
          $region44: #{tpu_custom_call.1} parent=39 // loop_body
            %s221 = smul.u32 %s216, 8
            %s222 = sadd.s32 %s214, %s221
            %s223 = sld [smem:[#allocation5 + %s222]]
            %s224 = scalar_lea.hbm %s1, %s223
            %s225 = smul.u32 %s208, 16
            %s226 = sadd.s32 %s221, %s225
            %s227 = scalar_lea.vmem [#allocation2], %s226
            %s228 = scalar_lea.sflag [#allocation3], %s208
            // Predicated region
            $region48: #{tpu_custom_call.1} parent=44 // pred_check
              _
            $region49: #{tpu_custom_call.1} parent=44 // pred_check_branch
              %230 = sbr.rel target = $region51
            $region50: #{tpu_custom_call.1} parent=44 // pred_region
              %231 = sst [smem:[#allocation12]] [#allocation11]
              %232 = sst [smem:[#allocation13]] [#allocation10]
            $region51: #{tpu_custom_call.1} parent=44 // pred_fallthru
              _
            %234 = shalt.err (0)
            %s236 = sshll.u32 %s224, 4
            %s237 = int_to_ptr.hbm [resolvable:$true] %s236
            %s238 = sshll.u32 %s227, 4
            %s239 = int_to_ptr.vmem [resolvable:$true] %s238
            %241 = dma.hbm_to_vmem [thread:$0]  %s237, 16, %s239, %s228
            %s242 = sadd.s32 %s221, 1
            %s243 = sadd.s32 %s214, %s242
            %s244 = sld [smem:[#allocation5 + %s243]]
            %s245 = scalar_lea.hbm %s1, %s244
            %s246 = sadd.s32 %s242, %s225
            %s247 = scalar_lea.vmem [#allocation2], %s246
            // Predicated region
            $region52: #{tpu_custom_call.1} parent=44 // pred_check
              _
            $region53: #{tpu_custom_call.1} parent=44 // pred_check_branch
              %249 = sbr.rel target = $region55
            $region54: #{tpu_custom_call.1} parent=44 // pred_region
              %250 = sst [smem:[#allocation12]] [#allocation15]
              %251 = sst [smem:[#allocation13]] [#allocation14]
            $region55: #{tpu_custom_call.1} parent=44 // pred_fallthru
              _
            %253 = shalt.err (0)
            %s255 = sshll.u32 %s245, 4
            %s256 = int_to_ptr.hbm [resolvable:$true] %s255
            %s257 = sshll.u32 %s247, 4
            %s258 = int_to_ptr.vmem [resolvable:$true] %s257
            %260 = dma.hbm_to_vmem [thread:$0]  %s256, 16, %s258, %s228
            %s261 = sadd.s32 %s221, 2
            %s262 = sadd.s32 %s214, %s261
            %s263 = sld [smem:[#allocation5 + %s262]]
            %s264 = scalar_lea.hbm %s1, %s263
            %s265 = sadd.s32 %s261, %s225
            %s266 = scalar_lea.vmem [#allocation2], %s265
            // Predicated region
            $region56: #{tpu_custom_call.1} parent=44 // pred_check
              _
            $region57: #{tpu_custom_call.1} parent=44 // pred_check_branch
              %268 = sbr.rel target = $region59
            $region58: #{tpu_custom_call.1} parent=44 // pred_region
              %269 = sst [smem:[#allocation12]] [#allocation17]
              %270 = sst [smem:[#allocation13]] [#allocation16]
            $region59: #{tpu_custom_call.1} parent=44 // pred_fallthru
              _
            %272 = shalt.err (0)
            %s274 = sshll.u32 %s264, 4
            %s275 = int_to_ptr.hbm [resolvable:$true] %s274
            %s276 = sshll.u32 %s266, 4
            %s277 = int_to_ptr.vmem [resolvable:$true] %s276
            %279 = dma.hbm_to_vmem [thread:$0]  %s275, 16, %s277, %s228
            %s280 = sadd.s32 %s221, 3
            %s281 = sadd.s32 %s214, %s280
            %s282 = sld [smem:[#allocation5 + %s281]]
            %s283 = scalar_lea.hbm %s1, %s282
            %s284 = sadd.s32 %s280, %s225
            %s285 = scalar_lea.vmem [#allocation2], %s284
            // Predicated region
            $region60: #{tpu_custom_call.1} parent=44 // pred_check
              _
            $region61: #{tpu_custom_call.1} parent=44 // pred_check_branch
              %287 = sbr.rel target = $region63
            $region62: #{tpu_custom_call.1} parent=44 // pred_region
              %288 = sst [smem:[#allocation12]] [#allocation19]
              %289 = sst [smem:[#allocation13]] [#allocation18]
            $region63: #{tpu_custom_call.1} parent=44 // pred_fallthru
              _
            %291 = shalt.err (0)
            %s293 = sshll.u32 %s283, 4
            %s294 = int_to_ptr.hbm [resolvable:$true] %s293
            %s295 = sshll.u32 %s285, 4
            %s296 = int_to_ptr.vmem [resolvable:$true] %s295
            %298 = dma.hbm_to_vmem [thread:$0]  %s294, 16, %s296, %s228
            %s299 = sadd.s32 %s221, 4
            %s300 = sadd.s32 %s214, %s299
            %s301 = sld [smem:[#allocation5 + %s300]]
            %s302 = scalar_lea.hbm %s1, %s301
            %s303 = sadd.s32 %s299, %s225
            %s304 = scalar_lea.vmem [#allocation2], %s303
            // Predicated region
            $region64: #{tpu_custom_call.1} parent=44 // pred_check
              _
            $region65: #{tpu_custom_call.1} parent=44 // pred_check_branch
              %306 = sbr.rel target = $region67
            $region66: #{tpu_custom_call.1} parent=44 // pred_region
              %307 = sst [smem:[#allocation12]] [#allocation21]
              %308 = sst [smem:[#allocation13]] [#allocation20]
            $region67: #{tpu_custom_call.1} parent=44 // pred_fallthru
              _
            %310 = shalt.err (0)
            %s312 = sshll.u32 %s302, 4
            %s313 = int_to_ptr.hbm [resolvable:$true] %s312
            %s314 = sshll.u32 %s304, 4
            %s315 = int_to_ptr.vmem [resolvable:$true] %s314
            %317 = dma.hbm_to_vmem [thread:$0]  %s313, 16, %s315, %s228
            %s318 = sadd.s32 %s221, 5
            %s319 = sadd.s32 %s214, %s318
            %s320 = sld [smem:[#allocation5 + %s319]]
            %s321 = scalar_lea.hbm %s1, %s320
            %s322 = sadd.s32 %s318, %s225
            %s323 = scalar_lea.vmem [#allocation2], %s322
            // Predicated region
            $region68: #{tpu_custom_call.1} parent=44 // pred_check
              _
            $region69: #{tpu_custom_call.1} parent=44 // pred_check_branch
              %325 = sbr.rel target = $region71
            $region70: #{tpu_custom_call.1} parent=44 // pred_region
              %326 = sst [smem:[#allocation12]] [#allocation23]
              %327 = sst [smem:[#allocation13]] [#allocation22]
            $region71: #{tpu_custom_call.1} parent=44 // pred_fallthru
              _
            %329 = shalt.err (0)
            %s331 = sshll.u32 %s321, 4
            %s332 = int_to_ptr.hbm [resolvable:$true] %s331
            %s333 = sshll.u32 %s323, 4
            %s334 = int_to_ptr.vmem [resolvable:$true] %s333
            %336 = dma.hbm_to_vmem [thread:$0]  %s332, 16, %s334, %s228
            %s337 = sadd.s32 %s221, 6
            %s338 = sadd.s32 %s214, %s337
            %s339 = sld [smem:[#allocation5 + %s338]]
            %s340 = scalar_lea.hbm %s1, %s339
            %s341 = sadd.s32 %s337, %s225
            %s342 = scalar_lea.vmem [#allocation2], %s341
            // Predicated region
            $region72: #{tpu_custom_call.1} parent=44 // pred_check
              _
            $region73: #{tpu_custom_call.1} parent=44 // pred_check_branch
              %344 = sbr.rel target = $region75
            $region74: #{tpu_custom_call.1} parent=44 // pred_region
              %345 = sst [smem:[#allocation12]] [#allocation25]
              %346 = sst [smem:[#allocation13]] [#allocation24]
            $region75: #{tpu_custom_call.1} parent=44 // pred_fallthru
              _
            %348 = shalt.err (0)
            %s350 = sshll.u32 %s340, 4
            %s351 = int_to_ptr.hbm [resolvable:$true] %s350
            %s352 = sshll.u32 %s342, 4
            %s353 = int_to_ptr.vmem [resolvable:$true] %s352
            %355 = dma.hbm_to_vmem [thread:$0]  %s351, 16, %s353, %s228
            %s356 = sadd.s32 %s221, 7
            %s357 = sadd.s32 %s214, %s356
            %s358 = sld [smem:[#allocation5 + %s357]]
            %s359 = scalar_lea.hbm %s1, %s358
            %s360 = sadd.s32 %s356, %s225
            %s361 = scalar_lea.vmem [#allocation2], %s360
            // Predicated region
            $region76: #{tpu_custom_call.1} parent=44 // pred_check
              _
            $region77: #{tpu_custom_call.1} parent=44 // pred_check_branch
              %363 = sbr.rel target = $region79
            $region78: #{tpu_custom_call.1} parent=44 // pred_region
              %364 = sst [smem:[#allocation12]] [#allocation27]
              %365 = sst [smem:[#allocation13]] [#allocation26]
            $region79: #{tpu_custom_call.1} parent=44 // pred_fallthru
              _
            %367 = shalt.err (0)
            %s369 = sshll.u32 %s359, 4
            %s370 = int_to_ptr.hbm [resolvable:$true] %s369
            %s371 = sshll.u32 %s361, 4
            %s372 = int_to_ptr.vmem [resolvable:$true] %s371
            %374 = dma.hbm_to_vmem [thread:$0]  %s370, 16, %s372, %s228
          $region45: #{tpu_custom_call.1} parent=39 // loop_footer
            %s220 = sadd.s32 1, %s216
          $region46: #{tpu_custom_call.1} parent=39 // loop_footer_branch
            %215 = sbr.rel target = $region42
          $region47: #{tpu_custom_call.1} parent=39 // loop_exit
            _
        $region40: #{tpu_custom_call.1} parent=31 // pred_fallthru
          _
        %s375 = sadd.s32 %s33, 1
        %p376 = scmp.lt.s32.totalorder %s375, 2
        // Predicated region
        $region80: #{tpu_custom_call.1} parent=31 // pred_check
          %p377 = pneg %p376
        $region81: #{tpu_custom_call.1} parent=31 // pred_check_branch
          %379 = sbr.rel (%p377) target = $region83
        $region82: #{tpu_custom_call.1} parent=31 // pred_region
          %s380 = sadd.s32 %s196, 1
          %s381 = smul.u32 %s380, 16
          loop: start=0, step=1, limit=2
          $region84: #{tpu_custom_call.1} parent=82 // loop_pre_header
            _
          $region85: #{tpu_custom_call.1} parent=82 // loop_header
            %s383 = sphi 0, %s387
            %p384 = scmp.ge.s32.totalorder %s383, 2
          $region86: #{tpu_custom_call.1} parent=82 // loop_header_branch
            %386 = sbr.rel (%p384) target = $region90
          $region87: #{tpu_custom_call.1} parent=82 // loop_body
            %s388 = smul.u32 %s383, 8
            %s389 = sadd.s32 %s381, %s388
            %s390 = sld [smem:[#allocation5 + %s389]]
            %s391 = scalar_lea.hbm %s1, %s390
            %s392 = smul.u32 %s209, 16
            %s393 = sadd.s32 %s388, %s392
            %s394 = scalar_lea.vmem [#allocation2], %s393
            %s395 = scalar_lea.sflag [#allocation3], %s209
            // Predicated region
            $region91: #{tpu_custom_call.1} parent=87 // pred_check
              _
            $region92: #{tpu_custom_call.1} parent=87 // pred_check_branch
              %397 = sbr.rel target = $region94
            $region93: #{tpu_custom_call.1} parent=87 // pred_region
              %398 = sst [smem:[#allocation12]] [#allocation29]
              %399 = sst [smem:[#allocation13]] [#allocation28]
            $region94: #{tpu_custom_call.1} parent=87 // pred_fallthru
              _
            %401 = shalt.err (0)
            %s403 = sshll.u32 %s391, 4
            %s404 = int_to_ptr.hbm [resolvable:$true] %s403
            %s405 = sshll.u32 %s394, 4
            %s406 = int_to_ptr.vmem [resolvable:$true] %s405
            %408 = dma.hbm_to_vmem [thread:$0]  %s404, 16, %s406, %s395
            %s409 = sadd.s32 %s388, 1
            %s410 = sadd.s32 %s381, %s409
            %s411 = sld [smem:[#allocation5 + %s410]]
            %s412 = scalar_lea.hbm %s1, %s411
            %s413 = sadd.s32 %s409, %s392
            %s414 = scalar_lea.vmem [#allocation2], %s413
            // Predicated region
            $region95: #{tpu_custom_call.1} parent=87 // pred_check
              _
            $region96: #{tpu_custom_call.1} parent=87 // pred_check_branch
              %416 = sbr.rel target = $region98
            $region97: #{tpu_custom_call.1} parent=87 // pred_region
              %417 = sst [smem:[#allocation12]] [#allocation31]
              %418 = sst [smem:[#allocation13]] [#allocation30]
            $region98: #{tpu_custom_call.1} parent=87 // pred_fallthru
              _
            %420 = shalt.err (0)
            %s422 = sshll.u32 %s412, 4
            %s423 = int_to_ptr.hbm [resolvable:$true] %s422
            %s424 = sshll.u32 %s414, 4
            %s425 = int_to_ptr.vmem [resolvable:$true] %s424
            %427 = dma.hbm_to_vmem [thread:$0]  %s423, 16, %s425, %s395
            %s428 = sadd.s32 %s388, 2
            %s429 = sadd.s32 %s381, %s428
            %s430 = sld [smem:[#allocation5 + %s429]]
            %s431 = scalar_lea.hbm %s1, %s430
            %s432 = sadd.s32 %s428, %s392
            %s433 = scalar_lea.vmem [#allocation2], %s432
            // Predicated region
            $region99: #{tpu_custom_call.1} parent=87 // pred_check
              _
            $region100: #{tpu_custom_call.1} parent=87 // pred_check_branch
              %435 = sbr.rel target = $region102
            $region101: #{tpu_custom_call.1} parent=87 // pred_region
              %436 = sst [smem:[#allocation12]] [#allocation33]
              %437 = sst [smem:[#allocation13]] [#allocation32]
            $region102: #{tpu_custom_call.1} parent=87 // pred_fallthru
              _
            %439 = shalt.err (0)
            %s441 = sshll.u32 %s431, 4
            %s442 = int_to_ptr.hbm [resolvable:$true] %s441
            %s443 = sshll.u32 %s433, 4
            %s444 = int_to_ptr.vmem [resolvable:$true] %s443
            %446 = dma.hbm_to_vmem [thread:$0]  %s442, 16, %s444, %s395
            %s447 = sadd.s32 %s388, 3
            %s448 = sadd.s32 %s381, %s447
            %s449 = sld [smem:[#allocation5 + %s448]]
            %s450 = scalar_lea.hbm %s1, %s449
            %s451 = sadd.s32 %s447, %s392
            %s452 = scalar_lea.vmem [#allocation2], %s451
            // Predicated region
            $region103: #{tpu_custom_call.1} parent=87 // pred_check
              _
            $region104: #{tpu_custom_call.1} parent=87 // pred_check_branch
              %454 = sbr.rel target = $region106
            $region105: #{tpu_custom_call.1} parent=87 // pred_region
              %455 = sst [smem:[#allocation12]] [#allocation35]
              %456 = sst [smem:[#allocation13]] [#allocation34]
            $region106: #{tpu_custom_call.1} parent=87 // pred_fallthru
              _
            %458 = shalt.err (0)
            %s460 = sshll.u32 %s450, 4
            %s461 = int_to_ptr.hbm [resolvable:$true] %s460
            %s462 = sshll.u32 %s452, 4
            %s463 = int_to_ptr.vmem [resolvable:$true] %s462
            %465 = dma.hbm_to_vmem [thread:$0]  %s461, 16, %s463, %s395
            %s466 = sadd.s32 %s388, 4
            %s467 = sadd.s32 %s381, %s466
            %s468 = sld [smem:[#allocation5 + %s467]]
            %s469 = scalar_lea.hbm %s1, %s468
            %s470 = sadd.s32 %s466, %s392
            %s471 = scalar_lea.vmem [#allocation2], %s470
            // Predicated region
            $region107: #{tpu_custom_call.1} parent=87 // pred_check
              _
            $region108: #{tpu_custom_call.1} parent=87 // pred_check_branch
              %473 = sbr.rel target = $region110
            $region109: #{tpu_custom_call.1} parent=87 // pred_region
              %474 = sst [smem:[#allocation12]] [#allocation37]
              %475 = sst [smem:[#allocation13]] [#allocation36]
            $region110: #{tpu_custom_call.1} parent=87 // pred_fallthru
              _
            %477 = shalt.err (0)
            %s479 = sshll.u32 %s469, 4
            %s480 = int_to_ptr.hbm [resolvable:$true] %s479
            %s481 = sshll.u32 %s471, 4
            %s482 = int_to_ptr.vmem [resolvable:$true] %s481
            %484 = dma.hbm_to_vmem [thread:$0]  %s480, 16, %s482, %s395
            %s485 = sadd.s32 %s388, 5
            %s486 = sadd.s32 %s381, %s485
            %s487 = sld [smem:[#allocation5 + %s486]]
            %s488 = scalar_lea.hbm %s1, %s487
            %s489 = sadd.s32 %s485, %s392
            %s490 = scalar_lea.vmem [#allocation2], %s489
            // Predicated region
            $region111: #{tpu_custom_call.1} parent=87 // pred_check
              _
            $region112: #{tpu_custom_call.1} parent=87 // pred_check_branch
              %492 = sbr.rel target = $region114
            $region113: #{tpu_custom_call.1} parent=87 // pred_region
              %493 = sst [smem:[#allocation12]] [#allocation39]
              %494 = sst [smem:[#allocation13]] [#allocation38]
            $region114: #{tpu_custom_call.1} parent=87 // pred_fallthru
              _
            %496 = shalt.err (0)
            %s498 = sshll.u32 %s488, 4
            %s499 = int_to_ptr.hbm [resolvable:$true] %s498
            %s500 = sshll.u32 %s490, 4
            %s501 = int_to_ptr.vmem [resolvable:$true] %s500
            %503 = dma.hbm_to_vmem [thread:$0]  %s499, 16, %s501, %s395
            %s504 = sadd.s32 %s388, 6
            %s505 = sadd.s32 %s381, %s504
            %s506 = sld [smem:[#allocation5 + %s505]]
            %s507 = scalar_lea.hbm %s1, %s506
            %s508 = sadd.s32 %s504, %s392
            %s509 = scalar_lea.vmem [#allocation2], %s508
            // Predicated region
            $region115: #{tpu_custom_call.1} parent=87 // pred_check
              _
            $region116: #{tpu_custom_call.1} parent=87 // pred_check_branch
              %511 = sbr.rel target = $region118
            $region117: #{tpu_custom_call.1} parent=87 // pred_region
              %512 = sst [smem:[#allocation12]] [#allocation41]
              %513 = sst [smem:[#allocation13]] [#allocation40]
            $region118: #{tpu_custom_call.1} parent=87 // pred_fallthru
              _
            %515 = shalt.err (0)
            %s517 = sshll.u32 %s507, 4
            %s518 = int_to_ptr.hbm [resolvable:$true] %s517
            %s519 = sshll.u32 %s509, 4
            %s520 = int_to_ptr.vmem [resolvable:$true] %s519
            %522 = dma.hbm_to_vmem [thread:$0]  %s518, 16, %s520, %s395
            %s523 = sadd.s32 %s388, 7
            %s524 = sadd.s32 %s381, %s523
            %s525 = sld [smem:[#allocation5 + %s524]]
            %s526 = scalar_lea.hbm %s1, %s525
            %s527 = sadd.s32 %s523, %s392
            %s528 = scalar_lea.vmem [#allocation2], %s527
            // Predicated region
            $region119: #{tpu_custom_call.1} parent=87 // pred_check
              _
            $region120: #{tpu_custom_call.1} parent=87 // pred_check_branch
              %530 = sbr.rel target = $region122
            $region121: #{tpu_custom_call.1} parent=87 // pred_region
              %531 = sst [smem:[#allocation12]] [#allocation43]
              %532 = sst [smem:[#allocation13]] [#allocation42]
            $region122: #{tpu_custom_call.1} parent=87 // pred_fallthru
              _
            %534 = shalt.err (0)
            %s536 = sshll.u32 %s526, 4
            %s537 = int_to_ptr.hbm [resolvable:$true] %s536
            %s538 = sshll.u32 %s528, 4
            %s539 = int_to_ptr.vmem [resolvable:$true] %s538
            %541 = dma.hbm_to_vmem [thread:$0]  %s537, 16, %s539, %s395
          $region88: #{tpu_custom_call.1} parent=82 // loop_footer
            %s387 = sadd.s32 1, %s383
          $region89: #{tpu_custom_call.1} parent=82 // loop_footer_branch
            %382 = sbr.rel target = $region85
          $region90: #{tpu_custom_call.1} parent=82 // loop_exit
            _
        $region83: #{tpu_custom_call.1} parent=31 // pred_fallthru
          _
        %s542 = smul.u32 %s208, 16
        %s543 = scalar_lea.vmem [#allocation2], %s542
        %s544 = scalar_lea.sflag [#allocation3], %s208
        %s545 = smul.u32 16, 1
        %s546 = sshll.u32 %s545, 4
        %547 = dma.done %s544, %s546
        %v548 = vld [vmem:[#allocation6] sm:$0xff]
        %v549 = vld [vmem:[#allocation6 + $0x8] sm:$0xff]
        %v550 = vld [vmem:[%s543] sm:$0xff]
        %v551 = vld [vmem:[%s543 + $0x8] sm:$0xff]
        %v552 = vadd.f32 %v550, %v548
        %v553 = vadd.f32 %v551, %v549
        %554 = vadd.xlane.f32.xlu0 %v552
        %v555 = vpop.xlane.xlu0 %554
        %556 = vadd.xlane.f32.xlu0 %v553
        %v557 = vpop.xlane.xlu0 %556
        %v558 = vrcp.pop 128.0
        %v559 = vmul.f32 128.0, %v558
        %v560 = vsub.f32 1.0, %v559
        %v561 = vmul.f32 %v558, %v560
        %v562 = vadd.f32 %v558, %v561
        %vm563 = vweird.f32 %v558
        %v564 = vsel %vm563, %v558, %v562
        %v565 = vmul.f32 %v555, %v564
        %v566 = vmul.f32 %v557, %v564
        %v567 = vsub.f32 %v552, %v565
        %v568 = vsub.f32 %v553, %v566
        %v569 = vmul.f32 %v567, %v567
        %v570 = vmul.f32 %v568, %v568
        %571 = vadd.xlane.f32.xlu0 %v569
        %v572 = vpop.xlane.xlu0 %571
        %573 = vadd.xlane.f32.xlu0 %v570
        %v574 = vpop.xlane.xlu0 %573
        %v575 = vmul.f32 %v572, %v564
        %v576 = vmul.f32 %v574, %v564
        %v577 = vld [vmem:[%s3] sm:$0x1]
        %v578 = vadd.f32 %v575, 1e-12
        %v579 = vadd.f32 %v576, 1e-12
        %v580 = vrsqrt.pop %v578
        %v581 = vmul.f32 %v580, %v578
        %v582 = vmul.f32 %v581, %v580
        %v583 = vmul.f32 0.5, %v582
        %v584 = vsub.f32 1.5, %v583
        %v585 = vmul.f32 %v580, %v584
        %vm586 = vweird.f32 %v578
        %vm587 = vweird.f32 %v580
        %vm588 = vmor %vm586, %vm587
        %v589 = vsel %vm588, %v580, %v585
        %v590 = vrsqrt.pop %v579
        %v591 = vmul.f32 %v590, %v579
        %v592 = vmul.f32 %v591, %v590
        %v593 = vmul.f32 0.5, %v592
        %v594 = vsub.f32 1.5, %v593
        %v595 = vmul.f32 %v590, %v594
        %vm596 = vweird.f32 %v579
        %vm597 = vweird.f32 %v590
        %vm598 = vmor %vm596, %vm597
        %v599 = vsel %vm598, %v590, %v595
        %v601 = vperm.slane %v577, 0
        %v603 = vmul.f32 %v601, %v589
        %v604 = vmul.f32 %v601, %v599
        %v605 = vmul.f32 %v567, %v603
        %v606 = vmul.f32 %v568, %v604
        %v607 = vld [vmem:[%s4] sm:$0x1]
        %v609 = vperm.slane %v607, 0
        %v611 = vadd.f32 %v605, %v609
        %v612 = vadd.f32 %v606, %v609
        %613 = vst [vmem:[%s191] sm:$0xff] %v611
        %614 = vst [vmem:[%s191 + $0x8] sm:$0xff] %v612
        %s615 = sand.u32 %s115, 1
        %s616 = scalar_lea.sflag [#allocation8], %s615
        %s617 = sand.u32 %s115, 1
        %s618 = smul.addr %s617, 16
        %s619 = scalar_lea.vmem [#allocation9], %s618
        // Predicated region
        $region123: #{tpu_custom_call.1} parent=31 // pred_check
          %p620 = pneg %p125
        $region124: #{tpu_custom_call.1} parent=31 // pred_check_branch
          %622 = sbr.rel (%p620) target = $region126
        $region125: #{tpu_custom_call.1} parent=31 // pred_region
          %s623 = smul.u32 %s32, 2
          %s624 = sadd.s32 %s623, %s33
          %s625 = smul.u32 2, %s624
          %627 = vsyncadd %s616, 0
          %s628 = smul.addr %s625, 8
          %s629 = scalar_lea.hbm %s5, %s628
          %s630 = sshll.u32 %s619, 4
          %s631 = int_to_ptr.vmem [resolvable:$true] %s630
          %s632 = sshll.u32 %s629, 4
          %s633 = int_to_ptr.hbm [resolvable:$true] %s632
          %638 = dma.vmem_to_hbm [thread:$0]  %s631, 256, %s633, %s616, 128, 128, 8
        $region126: #{tpu_custom_call.1} parent=31 // pred_fallthru
          _
      $region32: #{tpu_custom_call.1} parent=5 // pred_fallthru
        _
      %p639 = scmp.le.s32.totalorder 2, %s23
      // Predicated region
      $region127: #{tpu_custom_call.1} parent=5 // pred_check
        %p640 = pneg %p639
      $region128: #{tpu_custom_call.1} parent=5 // pred_check_branch
        %642 = sbr.rel (%p640) target = $region130
      $region129: #{tpu_custom_call.1} parent=5 // pred_region
        %s643 = ssub.s32 %s23, 2
        // Predicated region
        $region131: #{tpu_custom_call.1} parent=129 // pred_check
          %p644 = pneg %p131
        $region132: #{tpu_custom_call.1} parent=129 // pred_check_branch
          %646 = sbr.rel (%p644) target = $region134
        $region133: #{tpu_custom_call.1} parent=129 // pred_region
          %s647 = sand.u32 %s116, 1
          %s648 = scalar_lea.sflag [#allocation8], %s647
          %s649 = sand.u32 %s116, 1
          %s650 = smul.addr %s649, 16
          %s651 = scalar_lea.vmem [#allocation9], %s650
          %653 = dma.done %s648, 256
        $region134: #{tpu_custom_call.1} parent=129 // pred_fallthru
          _
      $region130: #{tpu_custom_call.1} parent=5 // pred_fallthru
        _
    $region6: #{tpu_custom_call.1} parent=1 // loop_footer
      %s27 = sadd.s32 1, %s23
    $region7: #{tpu_custom_call.1} parent=1 // loop_footer_branch
      %22 = sbr.rel target = $region3
    $region8: #{tpu_custom_call.1} parent=1 // loop_exit
      _
    %654 = vsyncpa [#allocation7], 1
    %s655 = scalar_lea.sflag [#allocation7], 1
    %656 = vsyncpa %s655, 1
    %657 = vsyncpa [#allocation8], 1
    %s658 = scalar_lea.sflag [#allocation8], 1
    %659 = vsyncpa %s658, 1
  %660 = vsyncmov [#allocation3]
  %s661 = vpop.sfrf %660
  %p662 = scmp.eq.s32.totalorder %s661, 0
  %p663 = pneg %p662
  %665 = shalt.err (%p663)
  %s666 = scalar_lea.sflag [#allocation3], 1
  %667 = vsyncmov %s666
  %s668 = vpop.sfrf %667
  %p669 = scmp.eq.s32.totalorder %s668, 0
  %p670 = pneg %p669
  %672 = shalt.err (%p670)

</llo_original>
